<compile_context>
chip_gen: v6e
topology: v6e:2x2x1
jax: 0.10.0
libtpu: 0.0.40
codegen_flags: <defaults>
</compile_context>

<pallas_src>
import functools

import jax
import jax.numpy as jnp
from jax.experimental import pallas as pl
from jax.experimental.pallas import tpu as pltpu

LANE = 128   # TPU lane width: output-channel padding target


def _round_up(x, m):
    return (x + m - 1) // m * m


# ----------------------------------------------------------------------------
# Pallas kernel: fused GEMM + bias + (optional) ReLU
# ----------------------------------------------------------------------------
def _gemm_bias_act_kernel(x_ref, w_ref, b_ref, o_ref, *, relu):
    # x_ref: (BM, K)  w_ref: (K, N)  b_ref: (1, N)  o_ref: (BM, N);  N % 128 == 0
    acc = jnp.dot(x_ref[...], w_ref[...], preferred_element_type=jnp.float32)
    acc = acc + b_ref[...]
    if relu:
        acc = jnp.maximum(acc, 0.0)
    o_ref[...] = acc.astype(o_ref.dtype)


def gemm_bias_act(x, w, b, *, relu, tm=512):
    """y = act(x @ w + b) on the MXU.  w/b must already be lane-padded (N % 128 == 0)."""
    M, K = x.shape
    Kw, N = w.shape
    assert K == Kw and N % LANE == 0
    # Whole problem in one block when it fits (no grid-step overhead, no padding);
    # otherwise 512-row tiles (8-sublane / 128-lane aligned) on a parallel grid axis.
    block_m = M if M <= tm else tm
    grid = (pl.cdiv(M, block_m),)
    # VMEM per step ~ 2*(block_m*K + block_m*N)*4 + K*N*4 bytes (< 4 MiB here, well
    # inside every generation's limit; raise vmem_limit_bytes only if shapes grow).
    return pl.pallas_call(
        functools.partial(_gemm_bias_act_kernel, relu=relu),
        out_shape=jax.ShapeDtypeStruct((M, N), jnp.float32),
        grid=grid,
        in_specs=[
            pl.BlockSpec((block_m, K), lambda i: (i, 0)),  # row tile of patches
            pl.BlockSpec((K, N), lambda i: (0, 0)),        # full weight, VMEM-resident
            pl.BlockSpec((1, N), lambda i: (0, 0)),        # bias row, VMEM-resident
        ],
        out_specs=pl.BlockSpec((block_m, N), lambda i: (i, 0)),
        compiler_params=pltpu.CompilerParams(dimension_semantics=("parallel",)),
    )(x, w, b.reshape(1, N))


# ----------------------------------------------------------------------------
# Glue: ConvTranspose2d -> stride-1 correlation (dilate + pad + im2col), in XLA
# ----------------------------------------------------------------------------
def convT_im2col(x_nhwc, ksize, stride, padding, output_padding):
    """Patches for ConvTranspose2d expressed as a stride-1 correlation over the
    zero-dilated, edge-padded input.  Column order = (kh, kw, c_in).
    Negative edge padding (e.g. k=2, p=2) crops the input."""
    lo = ksize - 1 - padding
    hi = ksize - 1 - padding + output_padding
    cfg = [(0, 0, 0), (lo, hi, stride - 1), (lo, hi, stride - 1), (0, 0, 0)]
    xp = jax.lax.pad(x_nhwc, jnp.array(0, x_nhwc.dtype), cfg)
    n, hp, wp, c = xp.shape
    ho, wo = hp - ksize + 1, wp - ksize + 1
    taps = [xp[:, i:i + ho, j:j + wo, :] for i in range(ksize) for j in range(ksize)]
    p = jnp.stack(taps, axis=3)                       # (N, Ho, Wo, k*k, C)
    return p.reshape(n * ho * wo, ksize * ksize * c), (n, ho, wo)


def convT_weight_to_gemm(w_ct, b):
    """PyTorch ConvTranspose2d weight (I, O, kh, kw) -> GEMM weight (kh*kw*I, O_pad):
    spatially flipped, in/out channels swapped, O zero-padded to a multiple of 128."""
    i, o, kh, kw = w_ct.shape
    o_pad = _round_up(o, LANE)
    w = jnp.flip(w_ct, axis=(2, 3))          # flip kh, kw
    w = jnp.transpose(w, (2, 3, 0, 1))       # (kh, kw, I, O) — matches im2col col order
    w = w.reshape(kh * kw * i, o)
    w = jnp.pad(w, ((0, 0), (0, o_pad - o)))
    bp = jnp.pad(b, (0, o_pad - o))
    return w, bp, o


# ----------------------------------------------------------------------------
# Decoder forward (NCHW in, NCHW out — same as PyTorch)
# ----------------------------------------------------------------------------
def decoder_forward(x_nchw, params):
    x = jnp.transpose(x_nchw, (0, 2, 3, 1))  # NCHW -> NHWC (tiny; fused by XLA)

    # layer 1: ConvTranspose2d(latent, 64, 3, s=2, p=1, op=1) + ReLU
    p, (n, ho, wo) = convT_im2col(x, 3, 2, 1, 1)
    w, b, c = convT_weight_to_gemm(params["w1"], params["b1"])
    y = gemm_bias_act(p, w, b, relu=True)
    x = y[:, :c].reshape(n, ho, wo, c)       # lane pad sliced; fuses into next im2col

    # layer 2: ConvTranspose2d(64, 32, 3, s=2, p=1, op=1) + ReLU
    p, (n, ho, wo) = convT_im2col(x, 3, 2, 1, 1)
    w, b, c = convT_weight_to_gemm(params["w2"], params["b2"])
    y = gemm_bias_act(p, w, b, relu=True)
    x = y[:, :c].reshape(n, ho, wo, c)

    # layer 3: ConvTranspose2d(32, out_dim, 2, s=1, p=2, op=0), no activation
    p, (n, ho, wo) = convT_im2col(x, 2, 1, 2, 0)
    w, b, c = convT_weight_to_gemm(params["w3"], params["b3"])
    y = gemm_bias_act(p, w, b, relu=False)
    x = y[:, :c].reshape(n, ho, wo, c)

    return jnp.transpose(x, (0, 3, 1, 2))    # NHWC -> NCHW


# ----------------------------------------------------------------------------
# Pure-JAX reference (mirrors PyTorch ConvTranspose2d semantics) for verification
# ----------------------------------------------------------------------------
def ref_forward(x, params):
    def convT(x, w_ct, b, k, s, p, op):
        w = jnp.transpose(jnp.flip(w_ct, (2, 3)), (1, 0, 2, 3))   # (O, I, kh, kw)
        lo, hi = k - 1 - p, k - 1 - p + op
        cfg = [(0, 0, 0), (0, 0, 0), (lo, hi, s - 1), (lo, hi, s - 1)]
        xp = jax.lax.pad(x, jnp.array(0, x.dtype), cfg)
        y = jax.lax.conv_general_dilated(
            xp, w, (1, 1), "VALID",
            dimension_numbers=("NCHW", "OIHW", "NCHW"),
            precision=jax.lax.Precision.HIGHEST)
        return y + b.reshape(1, -1, 1, 1)

    y = jax.nn.relu(convT(x, params["w1"], params["b1"], 3, 2, 1, 1))
    y = jax.nn.relu(convT(y, params["w2"], params["b2"], 3, 2, 1, 1))
    return convT(y, params["w3"], params["b3"], 2, 1, 2, 0)


def init_params(key, out_dim, latent_dim):
    ks = jax.random.split(key, 6)
    scale = 0.1
    return {
        # PyTorch ConvTranspose2d weight layout: (in_channels, out_channels, kh, kw)
        "w1": scale * jax.random.normal(ks[0], (latent_dim, 64, 3, 3), jnp.float32),
        "b1": scale * jax.random.normal(ks[1], (64,), jnp.float32),
        "w2": scale * jax.random.normal(ks[2], (64, 32, 3, 3), jnp.float32),
        "b2": scale * jax.random.normal(ks[3], (32,), jnp.float32),
        "w3": scale * jax.random.normal(ks[4], (32, out_dim, 2, 2), jnp.float32),
        "b3": scale * jax.random.normal(ks[5], (out_dim,), jnp.float32),
    }


if __name__ == "__main__":
    out_dim, latent_dim = 1, 16
    key = jax.random.PRNGKey(0)
    kx, kp = jax.random.split(key)

    x = jax.random.normal(kx, (2, latent_dim, 4, 4), jnp.float32)  # NCHW latents
    params = init_params(kp, out_dim, latent_dim)

    fwd = jax.jit(decoder_forward)
    out = jax.block_until_ready(fwd(x, params))
    ref = jax.block_until_ready(ref_forward(x, params))

    # spatial: 4 -> 8 -> 16 -> 13  ((H-1)*s - 2p + k + op)
    assert out.shape == (2, out_dim, 13, 13), out.shape
    err = float(jnp.max(jnp.abs(out - ref)))
    assert jnp.allclose(out, ref, atol=1e-3, rtol=1e-3), err
    print("KERNEL_OK")
</pallas_src>

<mosaic_0001>
module attributes {stable_mosaic.version = 11 : i64} {
  func.func @_gemm_bias_act_kernel(%arg0: i32, %arg1: memref<128x144xf32, #tpu.memory_space<vmem>>, %arg2: memref<144x128xf32, #tpu.memory_space<vmem>>, %arg3: memref<1x128xf32, #tpu.memory_space<vmem>>, %arg4: memref<128x128xf32, #tpu.memory_space<vmem>>) attributes {dimension_semantics = [#tpu.dimension_semantics<parallel>], iteration_bounds = array<i64: 1>, scalar_prefetch = 0 : i64, scratch_operands = 0 : i64, tpu.core_type = #tpu.core_type<tc>, window_params = [{transform_indices = @transform_0, window_bounds = array<i64: 128, 144>}, {pipeline_mode = #tpu.pipeline_mode<synchronous>, transform_indices = @transform_1, window_bounds = array<i64: 144, 128>}, {pipeline_mode = #tpu.pipeline_mode<synchronous>, transform_indices = @transform_2, window_bounds = array<i64: 1, 128>}, {transform_indices = @transform_3, window_bounds = array<i64: 128, 128>}]} {
    %c0 = arith.constant 0 : index
    %c0_0 = arith.constant 0 : index
    %0 = vector.load %arg1[%c0, %c0_0] : memref<128x144xf32, #tpu.memory_space<vmem>>, vector<128x144xf32>
    %c0_1 = arith.constant 0 : index
    %c0_2 = arith.constant 0 : index
    %1 = vector.load %arg2[%c0_1, %c0_2] : memref<144x128xf32, #tpu.memory_space<vmem>>, vector<144x128xf32>
    %cst = arith.constant dense<0.000000e+00> : vector<128x128xf32>
    %2 = tpu.matmul %0, %1, %cst {dimension_numbers = #tpu.dot_dimension_numbers<[1], [0], [0], [1], [0, 0, 1, 1], [], []>} : vector<128x144xf32>, vector<144x128xf32>, vector<128x128xf32> -> vector<128x128xf32>
    %c0_3 = arith.constant 0 : index
    %c0_4 = arith.constant 0 : index
    %3 = vector.load %arg3[%c0_3, %c0_4] : memref<1x128xf32, #tpu.memory_space<vmem>>, vector<1x128xf32>
    %4 = vector.broadcast %3 : vector<1x128xf32> to vector<128x128xf32>
    %5 = arith.addf %2, %4 : vector<128x128xf32>
    %cst_5 = arith.constant 0.000000e+00 : f32
    %6 = vector.broadcast %cst_5 : f32 to vector<128x128xf32>
    %7 = arith.maximumf %5, %6 : vector<128x128xf32>
    %c0_6 = arith.constant 0 : index
    %c0_7 = arith.constant 0 : index
    %8 = vector.load %arg4[%c0_6, %c0_7] : memref<128x128xf32, #tpu.memory_space<vmem>>, vector<128x128xf32>
    tpu.vector_store %arg4[%c0_6, %c0_7], %7 {strides = array<i32>} : memref<128x128xf32, #tpu.memory_space<vmem>>, vector<128x128xf32>,
    return
  }
  func.func @transform_0(%arg0: i32) -> (i32, i32) {
    %c0_i32 = arith.constant 0 : i32
    %c0_i32_0 = arith.constant 0 : i32
    return %arg0, %c0_i32 : i32, i32
  }
  func.func @transform_1(%arg0: i32) -> (i32, i32) {
    %c0_i32 = arith.constant 0 : i32
    %c0_i32_0 = arith.constant 0 : i32
    %c0_i32_1 = arith.constant 0 : i32
    return %c0_i32, %c0_i32_0 : i32, i32
  }
  func.func @transform_2(%arg0: i32) -> (i32, i32) {
    %c0_i32 = arith.constant 0 : i32
    %c0_i32_0 = arith.constant 0 : i32
    %c0_i32_1 = arith.constant 0 : i32
    return %c0_i32, %c0_i32_0 : i32, i32
  }
  func.func @transform_3(%arg0: i32) -> (i32, i32) {
    %c0_i32 = arith.constant 0 : i32
    %c0_i32_0 = arith.constant 0 : i32
    return %arg0, %c0_i32 : i32, i32
  }
}

module attributes {stable_mosaic.version = 11 : i64} {
  func.func @_gemm_bias_act_kernel(%arg0: i32, %arg1: memref<512x576xf32, #tpu.memory_space<vmem>>, %arg2: memref<576x128xf32, #tpu.memory_space<vmem>>, %arg3: memref<1x128xf32, #tpu.memory_space<vmem>>, %arg4: memref<512x128xf32, #tpu.memory_space<vmem>>) attributes {dimension_semantics = [#tpu.dimension_semantics<parallel>], iteration_bounds = array<i64: 1>, scalar_prefetch = 0 : i64, scratch_operands = 0 : i64, tpu.core_type = #tpu.core_type<tc>, window_params = [{transform_indices = @transform_0, window_bounds = array<i64: 512, 576>}, {pipeline_mode = #tpu.pipeline_mode<synchronous>, transform_indices = @transform_1, window_bounds = array<i64: 576, 128>}, {pipeline_mode = #tpu.pipeline_mode<synchronous>, transform_indices = @transform_2, window_bounds = array<i64: 1, 128>}, {transform_indices = @transform_3, window_bounds = array<i64: 512, 128>}]} {
    %c0 = arith.constant 0 : index
    %c0_0 = arith.constant 0 : index
    %0 = vector.load %arg1[%c0, %c0_0] : memref<512x576xf32, #tpu.memory_space<vmem>>, vector<512x576xf32>
    %c0_1 = arith.constant 0 : index
    %c0_2 = arith.constant 0 : index
    %1 = vector.load %arg2[%c0_1, %c0_2] : memref<576x128xf32, #tpu.memory_space<vmem>>, vector<576x128xf32>
    %cst = arith.constant dense<0.000000e+00> : vector<512x128xf32>
    %2 = tpu.matmul %0, %1, %cst {dimension_numbers = #tpu.dot_dimension_numbers<[1], [0], [0], [1], [0, 0, 1, 1], [], []>} : vector<512x576xf32>, vector<576x128xf32>, vector<512x128xf32> -> vector<512x128xf32>
    %c0_3 = arith.constant 0 : index
    %c0_4 = arith.constant 0 : index
    %3 = vector.load %arg3[%c0_3, %c0_4] : memref<1x128xf32, #tpu.memory_space<vmem>>, vector<1x128xf32>
    %4 = vector.broadcast %3 : vector<1x128xf32> to vector<512x128xf32>
    %5 = arith.addf %2, %4 : vector<512x128xf32>
    %cst_5 = arith.constant 0.000000e+00 : f32
    %6 = vector.broadcast %cst_5 : f32 to vector<512x128xf32>
    %7 = arith.maximumf %5, %6 : vector<512x128xf32>
    %c0_6 = arith.constant 0 : index
    %c0_7 = arith.constant 0 : index
    %8 = vector.load %arg4[%c0_6, %c0_7] : memref<512x128xf32, #tpu.memory_space<vmem>>, vector<512x128xf32>
    tpu.vector_store %arg4[%c0_6, %c0_7], %7 {strides = array<i32>} : memref<512x128xf32, #tpu.memory_space<vmem>>, vector<512x128xf32>,
    return
  }
  func.func @transform_0(%arg0: i32) -> (i32, i32) {
    %c0_i32 = arith.constant 0 : i32
    %c0_i32_0 = arith.constant 0 : i32
    return %arg0, %c0_i32 : i32, i32
  }
  func.func @transform_1(%arg0: i32) -> (i32, i32) {
    %c0_i32 = arith.constant 0 : i32
    %c0_i32_0 = arith.constant 0 : i32
    %c0_i32_1 = arith.constant 0 : i32
    return %c0_i32, %c0_i32_0 : i32, i32
  }
  func.func @transform_2(%arg0: i32) -> (i32, i32) {
    %c0_i32 = arith.constant 0 : i32
    %c0_i32_0 = arith.constant 0 : i32
    %c0_i32_1 = arith.constant 0 : i32
    return %c0_i32, %c0_i32_0 : i32, i32
  }
  func.func @transform_3(%arg0: i32) -> (i32, i32) {
    %c0_i32 = arith.constant 0 : i32
    %c0_i32_0 = arith.constant 0 : i32
    return %arg0, %c0_i32 : i32, i32
  }
}

module attributes {stable_mosaic.version = 11 : i64} {
  func.func @_gemm_bias_act_kernel(%arg0: i32, %arg1: memref<338x128xf32, #tpu.memory_space<vmem>>, %arg2: memref<128x128xf32, #tpu.memory_space<vmem>>, %arg3: memref<1x128xf32, #tpu.memory_space<vmem>>, %arg4: memref<338x128xf32, #tpu.memory_space<vmem>>) attributes {dimension_semantics = [#tpu.dimension_semantics<parallel>], iteration_bounds = array<i64: 1>, scalar_prefetch = 0 : i64, scratch_operands = 0 : i64, tpu.core_type = #tpu.core_type<tc>, window_params = [{transform_indices = @transform_0, window_bounds = array<i64: 338, 128>}, {pipeline_mode = #tpu.pipeline_mode<synchronous>, transform_indices = @transform_1, window_bounds = array<i64: 128, 128>}, {pipeline_mode = #tpu.pipeline_mode<synchronous>, transform_indices = @transform_2, window_bounds = array<i64: 1, 128>}, {transform_indices = @transform_3, window_bounds = array<i64: 338, 128>}]} {
    %c0 = arith.constant 0 : index
    %c0_0 = arith.constant 0 : index
    %0 = vector.load %arg1[%c0, %c0_0] : memref<338x128xf32, #tpu.memory_space<vmem>>, vector<338x128xf32>
    %c0_1 = arith.constant 0 : index
    %c0_2 = arith.constant 0 : index
    %1 = vector.load %arg2[%c0_1, %c0_2] : memref<128x128xf32, #tpu.memory_space<vmem>>, vector<128x128xf32>
    %cst = arith.constant dense<0.000000e+00> : vector<338x128xf32>
    %2 = tpu.matmul %0, %1, %cst {dimension_numbers = #tpu.dot_dimension_numbers<[1], [0], [0], [1], [0, 0, 1, 1], [], []>} : vector<338x128xf32>, vector<128x128xf32>, vector<338x128xf32> -> vector<338x128xf32>
    %c0_3 = arith.constant 0 : index
    %c0_4 = arith.constant 0 : index
    %3 = vector.load %arg3[%c0_3, %c0_4] : memref<1x128xf32, #tpu.memory_space<vmem>>, vector<1x128xf32>
    %4 = vector.broadcast %3 : vector<1x128xf32> to vector<338x128xf32>
    %5 = arith.addf %2, %4 : vector<338x128xf32>
    %c0_5 = arith.constant 0 : index
    %c0_6 = arith.constant 0 : index
    %6 = vector.load %arg4[%c0_5, %c0_6] : memref<338x128xf32, #tpu.memory_space<vmem>>, vector<338x128xf32>
    tpu.vector_store %arg4[%c0_5, %c0_6], %5 {strides = array<i32>} : memref<338x128xf32, #tpu.memory_space<vmem>>, vector<338x128xf32>,
    return
  }
  func.func @transform_0(%arg0: i32) -> (i32, i32) {
    %c0_i32 = arith.constant 0 : i32
    %c0_i32_0 = arith.constant 0 : i32
    return %arg0, %c0_i32 : i32, i32
  }
  func.func @transform_1(%arg0: i32) -> (i32, i32) {
    %c0_i32 = arith.constant 0 : i32
    %c0_i32_0 = arith.constant 0 : i32
    %c0_i32_1 = arith.constant 0 : i32
    return %c0_i32, %c0_i32_0 : i32, i32
  }
  func.func @transform_2(%arg0: i32) -> (i32, i32) {
    %c0_i32 = arith.constant 0 : i32
    %c0_i32_0 = arith.constant 0 : i32
    %c0_i32_1 = arith.constant 0 : i32
    return %c0_i32, %c0_i32_0 : i32, i32
  }
  func.func @transform_3(%arg0: i32) -> (i32, i32) {
    %c0_i32 = arith.constant 0 : i32
    %c0_i32_0 = arith.constant 0 : i32
    return %arg0, %c0_i32 : i32, i32
  }
}

</mosaic_0001>

<llo_original>
// kernel: decoder_forward.3
$region0: #{decoder_forward.3}
  #allocation0 [shape = 'u32[]', space=smem, size = 0x4, offset = 0x4, fixed_abs, tag = 'smem constant byte address 0x4 - core index']
  #allocation1 [shape = 'u32[144,128]{1,0:T(1,128)}', space=vmem, size = 0x12000, scoped, tag = 'internal scratch']
  %s0 = inlined_call_operand.vmem [shape: f32[128,144], index: 0, kind: input, shape index: {}]
  %s1 = inlined_call_operand.vmem [shape: f32[144,128], index: 1, kind: input, shape index: {}]
  %s2 = inlined_call_operand.vmem [shape: f32[1,128], index: 2, kind: input, shape index: {}]
  %s3 = inlined_call_operand.vmem [shape: f32[128,128], index: 3, kind: output, shape index: {}]
  %s4 = sld [smem:[#allocation0]]
  $region22: #{decoder_forward.3} parent=0
    _
  %s6 = ssub.s32 1, %s4
  %s7 = scalar_select 0, %s6, %s4
  // Predicated region
  $region2: #{decoder_forward.3} parent=0 // pred_check
    _
  $region3: #{decoder_forward.3} parent=0 // pred_check_branch
    %9 = sbr.rel (0) target = $region5
  $region4: #{decoder_forward.3} parent=0 // pred_region
    _
  $region5: #{decoder_forward.3} parent=0 // pred_fallthru
    _
  // Predicated region
  $region6: #{decoder_forward.3} parent=0 // pred_check
    _
  $region7: #{decoder_forward.3} parent=0 // pred_check_branch
    %11 = sbr.rel (0) target = $region9
  $region8: #{decoder_forward.3} parent=0 // pred_region
    _
  $region9: #{decoder_forward.3} parent=0 // pred_fallthru
    _
  // Predicated region
  $region10: #{decoder_forward.3} parent=0 // pred_check
    _
  $region11: #{decoder_forward.3} parent=0 // pred_check_branch
    %13 = sbr.rel (0) target = $region13
  $region12: #{decoder_forward.3} parent=0 // pred_region
    _
  $region13: #{decoder_forward.3} parent=0 // pred_fallthru
    _
  %v14 = vld [vmem:[%s0] sm:$0xff]
  %v15 = vld [vmem:[%s0 + $0x8] sm:$0xff]
  %v16 = vld [vmem:[%s0 + $0x10] sm:$0xff]
  %v17 = vld [vmem:[%s0 + $0x18] sm:$0xff]
  %v18 = vld [vmem:[%s0 + $0x20] sm:$0xff]
  %v19 = vld [vmem:[%s0 + $0x28] sm:$0xff]
  %v20 = vld [vmem:[%s0 + $0x30] sm:$0xff]
  %v21 = vld [vmem:[%s0 + $0x38] sm:$0xff]
  %v22 = vld [vmem:[%s0 + $0x40] sm:$0xff]
  %v23 = vld [vmem:[%s0 + $0x48] sm:$0xff]
  %v24 = vld [vmem:[%s0 + $0x50] sm:$0xff]
  %v25 = vld [vmem:[%s0 + $0x58] sm:$0xff]
  %v26 = vld [vmem:[%s0 + $0x60] sm:$0xff]
  %v27 = vld [vmem:[%s0 + $0x68] sm:$0xff]
  %v28 = vld [vmem:[%s0 + $0x70] sm:$0xff]
  %v29 = vld [vmem:[%s0 + $0x78] sm:$0xff]
  %v30 = vld [vmem:[%s0 + $0x80] sm:$0xff]
  %v31 = vld [vmem:[%s0 + $0x88] sm:$0xff]
  %v32 = vld [vmem:[%s0 + $0x90] sm:$0xff]
  %v33 = vld [vmem:[%s0 + $0x98] sm:$0xff]
  %v34 = vld [vmem:[%s0 + $0xa0] sm:$0xff]
  %v35 = vld [vmem:[%s0 + $0xa8] sm:$0xff]
  %v36 = vld [vmem:[%s0 + $0xb0] sm:$0xff]
  %v37 = vld [vmem:[%s0 + $0xb8] sm:$0xff]
  %v38 = vld [vmem:[%s0 + $0xc0] sm:$0xff]
  %v39 = vld [vmem:[%s0 + $0xc8] sm:$0xff]
  %v40 = vld [vmem:[%s0 + $0xd0] sm:$0xff]
  %v41 = vld [vmem:[%s0 + $0xd8] sm:$0xff]
  %v42 = vld [vmem:[%s0 + $0xe0] sm:$0xff]
  %v43 = vld [vmem:[%s0 + $0xe8] sm:$0xff]
  %v44 = vld [vmem:[%s0 + $0xf0] sm:$0xff]
  %v45 = vld [vmem:[%s0 + $0xf8] sm:$0xff]
  %v46 = vld [vmem:[%s1] sm:$0xff]
  %v47 = vld [vmem:[%s1 + $0x8] sm:$0xff]
  %v48 = vld [vmem:[%s1 + $0x10] sm:$0xff]
  %v49 = vld [vmem:[%s1 + $0x18] sm:$0xff]
  %v50 = vld [vmem:[%s1 + $0x20] sm:$0xff]
  %v51 = vld [vmem:[%s1 + $0x28] sm:$0xff]
  %v52 = vld [vmem:[%s1 + $0x30] sm:$0xff]
  %v53 = vld [vmem:[%s1 + $0x38] sm:$0xff]
  %v54 = vld [vmem:[%s1 + $0x40] sm:$0xff]
  %v55 = vld [vmem:[%s1 + $0x48] sm:$0xff]
  %v56 = vld [vmem:[%s1 + $0x50] sm:$0xff]
  %v57 = vld [vmem:[%s1 + $0x58] sm:$0xff]
  %v58 = vld [vmem:[%s1 + $0x60] sm:$0xff]
  %v59 = vld [vmem:[%s1 + $0x68] sm:$0xff]
  %v60 = vld [vmem:[%s1 + $0x70] sm:$0xff]
  %v61 = vld [vmem:[%s1 + $0x78] sm:$0xff]
  %v62 = vld [vmem:[%s1 + $0x80] sm:$0xff]
  %v63 = vld [vmem:[%s1 + $0x88] sm:$0xff]
  %v64 = vld [vmem:[%s2] sm:$0x1]
  %v66 = vlaneseq
  %v67 = vshrl.u32 %v66, 7
  %v68 = vsub.s32 0, %v67
  %v69 = vrot.slane %v64, %v68
  %vm71 = vcmask 130048
  %v73 = vsel %vm71, %v15, 0
  %v76 = vsel %vm71, %v17, 0
  %v79 = vsel %vm71, %v19, 0
  %v82 = vsel %vm71, %v21, 0
  %v85 = vsel %vm71, %v23, 0
  %v88 = vsel %vm71, %v25, 0
  %v91 = vsel %vm71, %v27, 0
  %v94 = vsel %vm71, %v29, 0
  %v97 = vsel %vm71, %v31, 0
  %v100 = vsel %vm71, %v33, 0
  %v103 = vsel %vm71, %v35, 0
  %v106 = vsel %vm71, %v37, 0
  %v109 = vsel %vm71, %v39, 0
  %v112 = vsel %vm71, %v41, 0
  %v115 = vsel %vm71, %v43, 0
  %v118 = vsel %vm71, %v45, 0
  %120 = vmatprep.subr.mxu0 0.0
  %121 = vmatpush1.msra.mxu0 %v61
  %122 = vmatprep.subr.mxu0 0.0
  %123 = vmatpush1.msra.mxu0 %v60
  %124 = vmatprep.subr.mxu0 0.0
  %125 = vmatpush1.msra.mxu0 %v59
  %126 = vmatprep.subr.mxu0 0.0
  %127 = vmatpush1.msra.mxu0 %v58
  %128 = vmatprep.subr.mxu0 0.0
  %129 = vmatpush1.msra.mxu0 %v57
  %130 = vmatprep.subr.mxu0 0.0
  %131 = vmatpush1.msra.mxu0 %v56
  %132 = vmatprep.subr.mxu0 0.0
  %133 = vmatpush1.msra.mxu0 %v55
  %134 = vmatprep.subr.mxu0 0.0
  %135 = vmatpush1.msra.mxu0 %v54
  %136 = vmatprep.subr.mxu0 0.0
  %137 = vmatpush1.msra.mxu0 %v53
  %138 = vmatprep.subr.mxu0 0.0
  %139 = vmatpush1.msra.mxu0 %v52
  %140 = vmatprep.subr.mxu0 0.0
  %141 = vmatpush1.msra.mxu0 %v51
  %142 = vmatprep.subr.mxu0 0.0
  %143 = vmatpush1.msra.mxu0 %v50
  %144 = vmatprep.subr.mxu0 0.0
  %145 = vmatpush1.msra.mxu0 %v49
  %146 = vmatprep.subr.mxu0 0.0
  %147 = vmatpush1.msra.mxu0 %v48
  %148 = vmatprep.subr.mxu0 0.0
  %149 = vmatpush1.msra.mxu0 %v47
  %150 = vmatprep.subr.mxu0 0.0
  %151 = vmatpush1.msra.mxu0 %v46
  %152 = vmatprep.subr.mxu0 0.0
  %153 = vmatpush2.msra.mxu0 0.0
  %154 = vmatprep.subr.mxu0 0.0
  %155 = vmatpush2.msra.mxu0 0.0
  %156 = vmatprep.subr.mxu0 0.0
  %157 = vmatpush2.msra.mxu0 0.0
  %158 = vmatprep.subr.mxu0 0.0
  %159 = vmatpush2.msra.mxu0 0.0
  %160 = vmatprep.subr.mxu0 0.0
  %161 = vmatpush2.msra.mxu0 0.0
  %162 = vmatprep.subr.mxu0 0.0
  %163 = vmatpush2.msra.mxu0 0.0
  %164 = vmatprep.subr.mxu0 0.0
  %165 = vmatpush2.msra.mxu0 0.0
  %166 = vmatprep.subr.mxu0 0.0
  %167 = vmatpush2.msra.mxu0 0.0
  %168 = vmatprep.subr.mxu0 0.0
  %169 = vmatpush2.msra.mxu0 0.0
  %170 = vmatprep.subr.mxu0 0.0
  %171 = vmatpush2.msra.mxu0 0.0
  %172 = vmatprep.subr.mxu0 0.0
  %173 = vmatpush2.msra.mxu0 0.0
  %174 = vmatprep.subr.mxu0 0.0
  %175 = vmatpush2.msra.mxu0 0.0
  %176 = vmatprep.subr.mxu0 0.0
  %177 = vmatpush2.msra.mxu0 0.0
  %178 = vmatprep.subr.mxu0 0.0
  %179 = vmatpush2.msra.mxu0 0.0
  %180 = vmatprep.subr.mxu0 0.0
  %181 = vmatpush2.msra.mxu0 %v63
  %182 = vmatprep.subr.mxu0 0.0
  %183 = vmatpush2.msra.mxu0 %v62
  %184 = vmatprep.mubr.f32.mxu0 %v73
  %185 = vmatmul.mubr.f32.gmra.mxu0 %v14
  %v186 = vpop.f32.mrf.mxu0
  %v187 = vadd.f32 %v69, %v186
  %v188 = vpop.f32.mrf.mxu0
  %189 = vmatprep.mubr.f32.mxu0 %v76
  %190 = vmatmul.mubr.f32.gmra.mxu0 %v16
  %v191 = vpop.f32.mrf.mxu0
  %v192 = vadd.f32 %v69, %v191
  %v193 = vpop.f32.mrf.mxu0
  %194 = vmatprep.mubr.f32.mxu0 %v79
  %195 = vmatmul.mubr.f32.gmra.mxu0 %v18
  %v196 = vpop.f32.mrf.mxu0
  %v197 = vadd.f32 %v69, %v196
  %v198 = vpop.f32.mrf.mxu0
  %199 = vmatprep.mubr.f32.mxu0 %v82
  %200 = vmatmul.mubr.f32.gmra.mxu0 %v20
  %v201 = vpop.f32.mrf.mxu0
  %v202 = vadd.f32 %v69, %v201
  %v203 = vpop.f32.mrf.mxu0
  %204 = vmatprep.mubr.f32.mxu0 %v85
  %205 = vmatmul.mubr.f32.gmra.mxu0 %v22
  %v206 = vpop.f32.mrf.mxu0
  %v207 = vadd.f32 %v69, %v206
  %v208 = vpop.f32.mrf.mxu0
  %209 = vmatprep.mubr.f32.mxu0 %v88
  %210 = vmatmul.mubr.f32.gmra.mxu0 %v24
  %v211 = vpop.f32.mrf.mxu0
  %v212 = vadd.f32 %v69, %v211
  %v213 = vpop.f32.mrf.mxu0
  %214 = vmatprep.mubr.f32.mxu0 %v91
  %215 = vmatmul.mubr.f32.gmra.mxu0 %v26
  %v216 = vpop.f32.mrf.mxu0
  %v217 = vadd.f32 %v69, %v216
  %v218 = vpop.f32.mrf.mxu0
  %219 = vmatprep.mubr.f32.mxu0 %v94
  %220 = vmatmul.mubr.f32.gmra.mxu0 %v28
  %v221 = vpop.f32.mrf.mxu0
  %v222 = vadd.f32 %v69, %v221
  %v223 = vpop.f32.mrf.mxu0
  %224 = vmatprep.mubr.f32.mxu0 %v97
  %225 = vmatmul.mubr.f32.gmra.mxu0 %v30
  %v226 = vpop.f32.mrf.mxu0
  %v227 = vadd.f32 %v69, %v226
  %v228 = vpop.f32.mrf.mxu0
  %229 = vmatprep.mubr.f32.mxu0 %v100
  %230 = vmatmul.mubr.f32.gmra.mxu0 %v32
  %v231 = vpop.f32.mrf.mxu0
  %v232 = vadd.f32 %v69, %v231
  %v233 = vpop.f32.mrf.mxu0
  %234 = vmatprep.mubr.f32.mxu0 %v103
  %235 = vmatmul.mubr.f32.gmra.mxu0 %v34
  %v236 = vpop.f32.mrf.mxu0
  %v237 = vadd.f32 %v69, %v236
  %v238 = vpop.f32.mrf.mxu0
  %239 = vmatprep.mubr.f32.mxu0 %v106
  %240 = vmatmul.mubr.f32.gmra.mxu0 %v36
  %v241 = vpop.f32.mrf.mxu0
  %v242 = vadd.f32 %v69, %v241
  %v243 = vpop.f32.mrf.mxu0
  %244 = vmatprep.mubr.f32.mxu0 %v109
  %245 = vmatmul.mubr.f32.gmra.mxu0 %v38
  %v246 = vpop.f32.mrf.mxu0
  %v247 = vadd.f32 %v69, %v246
  %v248 = vpop.f32.mrf.mxu0
  %249 = vmatprep.mubr.f32.mxu0 %v112
  %250 = vmatmul.mubr.f32.gmra.mxu0 %v40
  %v251 = vpop.f32.mrf.mxu0
  %v252 = vadd.f32 %v69, %v251
  %v253 = vpop.f32.mrf.mxu0
  %254 = vmatprep.mubr.f32.mxu0 %v115
  %255 = vmatmul.mubr.f32.gmra.mxu0 %v42
  %v256 = vpop.f32.mrf.mxu0
  %v257 = vadd.f32 %v69, %v256
  %v258 = vpop.f32.mrf.mxu0
  %259 = vmatprep.mubr.f32.mxu0 %v118
  %260 = vmatmul.mubr.f32.gmra.mxu0 %v44
  %v261 = vpop.f32.mrf.mxu0
  %v262 = vadd.f32 %v69, %v261
  %v263 = vpop.f32.mrf.mxu0
  %264 = vdwg.mxu0
  %v265 = vmax.f32 %v187, 0.0
  %v266 = vmax.f32 %v192, 0.0
  %v267 = vmax.f32 %v197, 0.0
  %v268 = vmax.f32 %v202, 0.0
  %v269 = vmax.f32 %v207, 0.0
  %v270 = vmax.f32 %v212, 0.0
  %v271 = vmax.f32 %v217, 0.0
  %v272 = vmax.f32 %v222, 0.0
  %v273 = vmax.f32 %v227, 0.0
  %v274 = vmax.f32 %v232, 0.0
  %v275 = vmax.f32 %v237, 0.0
  %v276 = vmax.f32 %v242, 0.0
  %v277 = vmax.f32 %v247, 0.0
  %v278 = vmax.f32 %v252, 0.0
  %v279 = vmax.f32 %v257, 0.0
  %v280 = vmax.f32 %v262, 0.0
  %281 = vst [vmem:[%s3] sm:$0xff] %v265
  %282 = vst [vmem:[%s3 + $0x8] sm:$0xff] %v266
  %283 = vst [vmem:[%s3 + $0x10] sm:$0xff] %v267
  %284 = vst [vmem:[%s3 + $0x18] sm:$0xff] %v268
  %285 = vst [vmem:[%s3 + $0x20] sm:$0xff] %v269
  %286 = vst [vmem:[%s3 + $0x28] sm:$0xff] %v270
  %287 = vst [vmem:[%s3 + $0x30] sm:$0xff] %v271
  %288 = vst [vmem:[%s3 + $0x38] sm:$0xff] %v272
  %289 = vst [vmem:[%s3 + $0x40] sm:$0xff] %v273
  %290 = vst [vmem:[%s3 + $0x48] sm:$0xff] %v274
  %291 = vst [vmem:[%s3 + $0x50] sm:$0xff] %v275
  %292 = vst [vmem:[%s3 + $0x58] sm:$0xff] %v276
  %293 = vst [vmem:[%s3 + $0x60] sm:$0xff] %v277
  %294 = vst [vmem:[%s3 + $0x68] sm:$0xff] %v278
  %295 = vst [vmem:[%s3 + $0x70] sm:$0xff] %v279
  %296 = vst [vmem:[%s3 + $0x78] sm:$0xff] %v280
  // Predicated region
  $region14: #{decoder_forward.3} parent=0 // pred_check
    _
  $region15: #{decoder_forward.3} parent=0 // pred_check_branch
    %298 = sbr.rel (0) target = $region17
  $region16: #{decoder_forward.3} parent=0 // pred_region
    _
  $region17: #{decoder_forward.3} parent=0 // pred_fallthru
    _
  // Predicated region
  $region18: #{decoder_forward.3} parent=0 // pred_check
    _
  $region19: #{decoder_forward.3} parent=0 // pred_check_branch
    %300 = sbr.rel (0) target = $region21
  $region20: #{decoder_forward.3} parent=0 // pred_region
    _
  $region21: #{decoder_forward.3} parent=0 // pred_fallthru
    _

// kernel: decoder_forward.4
$region0: #{decoder_forward.4}
  #allocation0 [shape = 'u32[]', space=smem, size = 0x4, offset = 0x4, fixed_abs, tag = 'smem constant byte address 0x4 - core index']
  #allocation1 [shape = 'u32[144,128]{1,0:T(1,128)}', space=vmem, size = 0x12000, scoped, tag = 'internal scratch']
  %s0 = inlined_call_operand.vmem [shape: f32[512,576], index: 0, kind: input, shape index: {}]
  %s1 = inlined_call_operand.vmem [shape: f32[576,128], index: 1, kind: input, shape index: {}]
  %s2 = inlined_call_operand.vmem [shape: f32[1,128], index: 2, kind: input, shape index: {}]
  %s3 = inlined_call_operand.vmem [shape: f32[512,128], index: 3, kind: output, shape index: {}]
  %s4 = sld [smem:[#allocation0]]
  $region22: #{decoder_forward.4} parent=0
    _
  %s6 = ssub.s32 1, %s4
  %s7 = scalar_select 0, %s6, %s4
  // Predicated region
  $region2: #{decoder_forward.4} parent=0 // pred_check
    _
  $region3: #{decoder_forward.4} parent=0 // pred_check_branch
    %9 = sbr.rel (0) target = $region5
  $region4: #{decoder_forward.4} parent=0 // pred_region
    _
  $region5: #{decoder_forward.4} parent=0 // pred_fallthru
    _
  // Predicated region
  $region6: #{decoder_forward.4} parent=0 // pred_check
    _
  $region7: #{decoder_forward.4} parent=0 // pred_check_branch
    %11 = sbr.rel (0) target = $region9
  $region8: #{decoder_forward.4} parent=0 // pred_region
    _
  $region9: #{decoder_forward.4} parent=0 // pred_fallthru
    _
  // Predicated region
  $region10: #{decoder_forward.4} parent=0 // pred_check
    _
  $region11: #{decoder_forward.4} parent=0 // pred_check_branch
    %13 = sbr.rel (0) target = $region13
  $region12: #{decoder_forward.4} parent=0 // pred_region
    _
  $region13: #{decoder_forward.4} parent=0 // pred_fallthru
    _
  %v14 = vld [vmem:[%s0] sm:$0xff]
  %v15 = vld [vmem:[%s0 + $0x8] sm:$0xff]
  %v16 = vld [vmem:[%s0 + $0x10] sm:$0xff]
  %v17 = vld [vmem:[%s0 + $0x18] sm:$0xff]
  %v18 = vld [vmem:[%s0 + $0x20] sm:$0xff]
  %v19 = vld [vmem:[%s0 + $0x28] sm:$0xff]
  %v20 = vld [vmem:[%s0 + $0x30] sm:$0xff]
  %v21 = vld [vmem:[%s0 + $0x38] sm:$0xff]
  %v22 = vld [vmem:[%s0 + $0x40] sm:$0xff]
  %v23 = vld [vmem:[%s0 + $0x48] sm:$0xff]
  %v24 = vld [vmem:[%s0 + $0x50] sm:$0xff]
  %v25 = vld [vmem:[%s0 + $0x58] sm:$0xff]
  %v26 = vld [vmem:[%s0 + $0x60] sm:$0xff]
  %v27 = vld [vmem:[%s0 + $0x68] sm:$0xff]
  %v28 = vld [vmem:[%s0 + $0x70] sm:$0xff]
  %v29 = vld [vmem:[%s0 + $0x78] sm:$0xff]
  %v30 = vld [vmem:[%s0 + $0x80] sm:$0xff]
  %v31 = vld [vmem:[%s0 + $0x88] sm:$0xff]
  %v32 = vld [vmem:[%s0 + $0x90] sm:$0xff]
  %v33 = vld [vmem:[%s0 + $0x98] sm:$0xff]
  %v34 = vld [vmem:[%s0 + $0xa0] sm:$0xff]
  %v35 = vld [vmem:[%s0 + $0xa8] sm:$0xff]
  %v36 = vld [vmem:[%s0 + $0xb0] sm:$0xff]
  %v37 = vld [vmem:[%s0 + $0xb8] sm:$0xff]
  %v38 = vld [vmem:[%s0 + $0xc0] sm:$0xff]
  %v39 = vld [vmem:[%s0 + $0xc8] sm:$0xff]
  %v40 = vld [vmem:[%s0 + $0xd0] sm:$0xff]
  %v41 = vld [vmem:[%s0 + $0xd8] sm:$0xff]
  %v42 = vld [vmem:[%s0 + $0xe0] sm:$0xff]
  %v43 = vld [vmem:[%s0 + $0xe8] sm:$0xff]
  %v44 = vld [vmem:[%s0 + $0xf0] sm:$0xff]
  %v45 = vld [vmem:[%s0 + $0xf8] sm:$0xff]
  %v46 = vld [vmem:[%s0 + $0x100] sm:$0xff]
  %v47 = vld [vmem:[%s0 + $0x108] sm:$0xff]
  %v48 = vld [vmem:[%s0 + $0x110] sm:$0xff]
  %v49 = vld [vmem:[%s0 + $0x118] sm:$0xff]
  %v50 = vld [vmem:[%s0 + $0x120] sm:$0xff]
  %v51 = vld [vmem:[%s0 + $0x128] sm:$0xff]
  %v52 = vld [vmem:[%s0 + $0x130] sm:$0xff]
  %v53 = vld [vmem:[%s0 + $0x138] sm:$0xff]
  %v54 = vld [vmem:[%s0 + $0x140] sm:$0xff]
  %v55 = vld [vmem:[%s0 + $0x148] sm:$0xff]
  %v56 = vld [vmem:[%s0 + $0x150] sm:$0xff]
  %v57 = vld [vmem:[%s0 + $0x158] sm:$0xff]
  %v58 = vld [vmem:[%s0 + $0x160] sm:$0xff]
  %v59 = vld [vmem:[%s0 + $0x168] sm:$0xff]
  %v60 = vld [vmem:[%s0 + $0x170] sm:$0xff]
  %v61 = vld [vmem:[%s0 + $0x178] sm:$0xff]
  %v62 = vld [vmem:[%s0 + $0x180] sm:$0xff]
  %v63 = vld [vmem:[%s0 + $0x188] sm:$0xff]
  %v64 = vld [vmem:[%s0 + $0x190] sm:$0xff]
  %v65 = vld [vmem:[%s0 + $0x198] sm:$0xff]
  %v66 = vld [vmem:[%s0 + $0x1a0] sm:$0xff]
  %v67 = vld [vmem:[%s0 + $0x1a8] sm:$0xff]
  %v68 = vld [vmem:[%s0 + $0x1b0] sm:$0xff]
  %v69 = vld [vmem:[%s0 + $0x1b8] sm:$0xff]
  %v70 = vld [vmem:[%s0 + $0x1c0] sm:$0xff]
  %v71 = vld [vmem:[%s0 + $0x1c8] sm:$0xff]
  %v72 = vld [vmem:[%s0 + $0x1d0] sm:$0xff]
  %v73 = vld [vmem:[%s0 + $0x1d8] sm:$0xff]
  %v74 = vld [vmem:[%s0 + $0x1e0] sm:$0xff]
  %v75 = vld [vmem:[%s0 + $0x1e8] sm:$0xff]
  %v76 = vld [vmem:[%s0 + $0x1f0] sm:$0xff]
  %v77 = vld [vmem:[%s0 + $0x1f8] sm:$0xff]
  %v78 = vld [vmem:[%s0 + $0x200] sm:$0xff]
  %v79 = vld [vmem:[%s0 + $0x208] sm:$0xff]
  %v80 = vld [vmem:[%s0 + $0x210] sm:$0xff]
  %v81 = vld [vmem:[%s0 + $0x218] sm:$0xff]
  %v82 = vld [vmem:[%s0 + $0x220] sm:$0xff]
  %v83 = vld [vmem:[%s0 + $0x228] sm:$0xff]
  %v84 = vld [vmem:[%s0 + $0x230] sm:$0xff]
  %v85 = vld [vmem:[%s0 + $0x238] sm:$0xff]
  %v86 = vld [vmem:[%s0 + $0x240] sm:$0xff]
  %v87 = vld [vmem:[%s0 + $0x248] sm:$0xff]
  %v88 = vld [vmem:[%s0 + $0x250] sm:$0xff]
  %v89 = vld [vmem:[%s0 + $0x258] sm:$0xff]
  %v90 = vld [vmem:[%s0 + $0x260] sm:$0xff]
  %v91 = vld [vmem:[%s0 + $0x268] sm:$0xff]
  %v92 = vld [vmem:[%s0 + $0x270] sm:$0xff]
  %v93 = vld [vmem:[%s0 + $0x278] sm:$0xff]
  %v94 = vld [vmem:[%s0 + $0x280] sm:$0xff]
  %v95 = vld [vmem:[%s0 + $0x288] sm:$0xff]
  %v96 = vld [vmem:[%s0 + $0x290] sm:$0xff]
  %v97 = vld [vmem:[%s0 + $0x298] sm:$0xff]
  %v98 = vld [vmem:[%s0 + $0x2a0] sm:$0xff]
  %v99 = vld [vmem:[%s0 + $0x2a8] sm:$0xff]
  %v100 = vld [vmem:[%s0 + $0x2b0] sm:$0xff]
  %v101 = vld [vmem:[%s0 + $0x2b8] sm:$0xff]
  %v102 = vld [vmem:[%s0 + $0x2c0] sm:$0xff]
  %v103 = vld [vmem:[%s0 + $0x2c8] sm:$0xff]
  %v104 = vld [vmem:[%s0 + $0x2d0] sm:$0xff]
  %v105 = vld [vmem:[%s0 + $0x2d8] sm:$0xff]
  %v106 = vld [vmem:[%s0 + $0x2e0] sm:$0xff]
  %v107 = vld [vmem:[%s0 + $0x2e8] sm:$0xff]
  %v108 = vld [vmem:[%s0 + $0x2f0] sm:$0xff]
  %v109 = vld [vmem:[%s0 + $0x2f8] sm:$0xff]
  %v110 = vld [vmem:[%s0 + $0x300] sm:$0xff]
  %v111 = vld [vmem:[%s0 + $0x308] sm:$0xff]
  %v112 = vld [vmem:[%s0 + $0x310] sm:$0xff]
  %v113 = vld [vmem:[%s0 + $0x318] sm:$0xff]
  %v114 = vld [vmem:[%s0 + $0x320] sm:$0xff]
  %v115 = vld [vmem:[%s0 + $0x328] sm:$0xff]
  %v116 = vld [vmem:[%s0 + $0x330] sm:$0xff]
  %v117 = vld [vmem:[%s0 + $0x338] sm:$0xff]
  %v118 = vld [vmem:[%s0 + $0x340] sm:$0xff]
  %v119 = vld [vmem:[%s0 + $0x348] sm:$0xff]
  %v120 = vld [vmem:[%s0 + $0x350] sm:$0xff]
  %v121 = vld [vmem:[%s0 + $0x358] sm:$0xff]
  %v122 = vld [vmem:[%s0 + $0x360] sm:$0xff]
  %v123 = vld [vmem:[%s0 + $0x368] sm:$0xff]
  %v124 = vld [vmem:[%s0 + $0x370] sm:$0xff]
  %v125 = vld [vmem:[%s0 + $0x378] sm:$0xff]
  %v126 = vld [vmem:[%s0 + $0x380] sm:$0xff]
  %v127 = vld [vmem:[%s0 + $0x388] sm:$0xff]
  %v128 = vld [vmem:[%s0 + $0x390] sm:$0xff]
  %v129 = vld [vmem:[%s0 + $0x398] sm:$0xff]
  %v130 = vld [vmem:[%s0 + $0x3a0] sm:$0xff]
  %v131 = vld [vmem:[%s0 + $0x3a8] sm:$0xff]
  %v132 = vld [vmem:[%s0 + $0x3b0] sm:$0xff]
  %v133 = vld [vmem:[%s0 + $0x3b8] sm:$0xff]
  %v134 = vld [vmem:[%s0 + $0x3c0] sm:$0xff]
  %v135 = vld [vmem:[%s0 + $0x3c8] sm:$0xff]
  %v136 = vld [vmem:[%s0 + $0x3d0] sm:$0xff]
  %v137 = vld [vmem:[%s0 + $0x3d8] sm:$0xff]
  %v138 = vld [vmem:[%s0 + $0x3e0] sm:$0xff]
  %v139 = vld [vmem:[%s0 + $0x3e8] sm:$0xff]
  %v140 = vld [vmem:[%s0 + $0x3f0] sm:$0xff]
  %v141 = vld [vmem:[%s0 + $0x3f8] sm:$0xff]
  %v142 = vld [vmem:[%s0 + $0x400] sm:$0xff]
  %v143 = vld [vmem:[%s0 + $0x408] sm:$0xff]
  %v144 = vld [vmem:[%s0 + $0x410] sm:$0xff]
  %v145 = vld [vmem:[%s0 + $0x418] sm:$0xff]
  %v146 = vld [vmem:[%s0 + $0x420] sm:$0xff]
  %v147 = vld [vmem:[%s0 + $0x428] sm:$0xff]
  %v148 = vld [vmem:[%s0 + $0x430] sm:$0xff]
  %v149 = vld [vmem:[%s0 + $0x438] sm:$0xff]
  %v150 = vld [vmem:[%s0 + $0x440] sm:$0xff]
  %v151 = vld [vmem:[%s0 + $0x448] sm:$0xff]
  %v152 = vld [vmem:[%s0 + $0x450] sm:$0xff]
  %v153 = vld [vmem:[%s0 + $0x458] sm:$0xff]
  %v154 = vld [vmem:[%s0 + $0x460] sm:$0xff]
  %v155 = vld [vmem:[%s0 + $0x468] sm:$0xff]
  %v156 = vld [vmem:[%s0 + $0x470] sm:$0xff]
  %v157 = vld [vmem:[%s0 + $0x478] sm:$0xff]
  %v158 = vld [vmem:[%s0 + $0x480] sm:$0xff]
  %v159 = vld [vmem:[%s0 + $0x488] sm:$0xff]
  %v160 = vld [vmem:[%s0 + $0x490] sm:$0xff]
  %v161 = vld [vmem:[%s0 + $0x498] sm:$0xff]
  %v162 = vld [vmem:[%s0 + $0x4a0] sm:$0xff]
  %v163 = vld [vmem:[%s0 + $0x4a8] sm:$0xff]
  %v164 = vld [vmem:[%s0 + $0x4b0] sm:$0xff]
  %v165 = vld [vmem:[%s0 + $0x4b8] sm:$0xff]
  %v166 = vld [vmem:[%s0 + $0x4c0] sm:$0xff]
  %v167 = vld [vmem:[%s0 + $0x4c8] sm:$0xff]
  %v168 = vld [vmem:[%s0 + $0x4d0] sm:$0xff]
  %v169 = vld [vmem:[%s0 + $0x4d8] sm:$0xff]
  %v170 = vld [vmem:[%s0 + $0x4e0] sm:$0xff]
  %v171 = vld [vmem:[%s0 + $0x4e8] sm:$0xff]
  %v172 = vld [vmem:[%s0 + $0x4f0] sm:$0xff]
  %v173 = vld [vmem:[%s0 + $0x4f8] sm:$0xff]
  %v174 = vld [vmem:[%s0 + $0x500] sm:$0xff]
  %v175 = vld [vmem:[%s0 + $0x508] sm:$0xff]
  %v176 = vld [vmem:[%s0 + $0x510] sm:$0xff]
  %v177 = vld [vmem:[%s0 + $0x518] sm:$0xff]
  %v178 = vld [vmem:[%s0 + $0x520] sm:$0xff]
  %v179 = vld [vmem:[%s0 + $0x528] sm:$0xff]
  %v180 = vld [vmem:[%s0 + $0x530] sm:$0xff]
  %v181 = vld [vmem:[%s0 + $0x538] sm:$0xff]
  %v182 = vld [vmem:[%s0 + $0x540] sm:$0xff]
  %v183 = vld [vmem:[%s0 + $0x548] sm:$0xff]
  %v184 = vld [vmem:[%s0 + $0x550] sm:$0xff]
  %v185 = vld [vmem:[%s0 + $0x558] sm:$0xff]
  %v186 = vld [vmem:[%s0 + $0x560] sm:$0xff]
  %v187 = vld [vmem:[%s0 + $0x568] sm:$0xff]
  %v188 = vld [vmem:[%s0 + $0x570] sm:$0xff]
  %v189 = vld [vmem:[%s0 + $0x578] sm:$0xff]
  %v190 = vld [vmem:[%s0 + $0x580] sm:$0xff]
  %v191 = vld [vmem:[%s0 + $0x588] sm:$0xff]
  %v192 = vld [vmem:[%s0 + $0x590] sm:$0xff]
  %v193 = vld [vmem:[%s0 + $0x598] sm:$0xff]
  %v194 = vld [vmem:[%s0 + $0x5a0] sm:$0xff]
  %v195 = vld [vmem:[%s0 + $0x5a8] sm:$0xff]
  %v196 = vld [vmem:[%s0 + $0x5b0] sm:$0xff]
  %v197 = vld [vmem:[%s0 + $0x5b8] sm:$0xff]
  %v198 = vld [vmem:[%s0 + $0x5c0] sm:$0xff]
  %v199 = vld [vmem:[%s0 + $0x5c8] sm:$0xff]
  %v200 = vld [vmem:[%s0 + $0x5d0] sm:$0xff]
  %v201 = vld [vmem:[%s0 + $0x5d8] sm:$0xff]
  %v202 = vld [vmem:[%s0 + $0x5e0] sm:$0xff]
  %v203 = vld [vmem:[%s0 + $0x5e8] sm:$0xff]
  %v204 = vld [vmem:[%s0 + $0x5f0] sm:$0xff]
  %v205 = vld [vmem:[%s0 + $0x5f8] sm:$0xff]
  %v206 = vld [vmem:[%s0 + $0x600] sm:$0xff]
  %v207 = vld [vmem:[%s0 + $0x608] sm:$0xff]
  %v208 = vld [vmem:[%s0 + $0x610] sm:$0xff]
  %v209 = vld [vmem:[%s0 + $0x618] sm:$0xff]
  %v210 = vld [vmem:[%s0 + $0x620] sm:$0xff]
  %v211 = vld [vmem:[%s0 + $0x628] sm:$0xff]
  %v212 = vld [vmem:[%s0 + $0x630] sm:$0xff]
  %v213 = vld [vmem:[%s0 + $0x638] sm:$0xff]
  %v214 = vld [vmem:[%s0 + $0x640] sm:$0xff]
  %v215 = vld [vmem:[%s0 + $0x648] sm:$0xff]
  %v216 = vld [vmem:[%s0 + $0x650] sm:$0xff]
  %v217 = vld [vmem:[%s0 + $0x658] sm:$0xff]
  %v218 = vld [vmem:[%s0 + $0x660] sm:$0xff]
  %v219 = vld [vmem:[%s0 + $0x668] sm:$0xff]
  %v220 = vld [vmem:[%s0 + $0x670] sm:$0xff]
  %v221 = vld [vmem:[%s0 + $0x678] sm:$0xff]
  %v222 = vld [vmem:[%s0 + $0x680] sm:$0xff]
  %v223 = vld [vmem:[%s0 + $0x688] sm:$0xff]
  %v224 = vld [vmem:[%s0 + $0x690] sm:$0xff]
  %v225 = vld [vmem:[%s0 + $0x698] sm:$0xff]
  %v226 = vld [vmem:[%s0 + $0x6a0] sm:$0xff]
  %v227 = vld [vmem:[%s0 + $0x6a8] sm:$0xff]
  %v228 = vld [vmem:[%s0 + $0x6b0] sm:$0xff]
  %v229 = vld [vmem:[%s0 + $0x6b8] sm:$0xff]
  %v230 = vld [vmem:[%s0 + $0x6c0] sm:$0xff]
  %v231 = vld [vmem:[%s0 + $0x6c8] sm:$0xff]
  %v232 = vld [vmem:[%s0 + $0x6d0] sm:$0xff]
  %v233 = vld [vmem:[%s0 + $0x6d8] sm:$0xff]
  %v234 = vld [vmem:[%s0 + $0x6e0] sm:$0xff]
  %v235 = vld [vmem:[%s0 + $0x6e8] sm:$0xff]
  %v236 = vld [vmem:[%s0 + $0x6f0] sm:$0xff]
  %v237 = vld [vmem:[%s0 + $0x6f8] sm:$0xff]
  %v238 = vld [vmem:[%s0 + $0x700] sm:$0xff]
  %v239 = vld [vmem:[%s0 + $0x708] sm:$0xff]
  %v240 = vld [vmem:[%s0 + $0x710] sm:$0xff]
  %v241 = vld [vmem:[%s0 + $0x718] sm:$0xff]
  %v242 = vld [vmem:[%s0 + $0x720] sm:$0xff]
  %v243 = vld [vmem:[%s0 + $0x728] sm:$0xff]
  %v244 = vld [vmem:[%s0 + $0x730] sm:$0xff]
  %v245 = vld [vmem:[%s0 + $0x738] sm:$0xff]
  %v246 = vld [vmem:[%s0 + $0x740] sm:$0xff]
  %v247 = vld [vmem:[%s0 + $0x748] sm:$0xff]
  %v248 = vld [vmem:[%s0 + $0x750] sm:$0xff]
  %v249 = vld [vmem:[%s0 + $0x758] sm:$0xff]
  %v250 = vld [vmem:[%s0 + $0x760] sm:$0xff]
  %v251 = vld [vmem:[%s0 + $0x768] sm:$0xff]
  %v252 = vld [vmem:[%s0 + $0x770] sm:$0xff]
  %v253 = vld [vmem:[%s0 + $0x778] sm:$0xff]
  %v254 = vld [vmem:[%s0 + $0x780] sm:$0xff]
  %v255 = vld [vmem:[%s0 + $0x788] sm:$0xff]
  %v256 = vld [vmem:[%s0 + $0x790] sm:$0xff]
  %v257 = vld [vmem:[%s0 + $0x798] sm:$0xff]
  %v258 = vld [vmem:[%s0 + $0x7a0] sm:$0xff]
  %v259 = vld [vmem:[%s0 + $0x7a8] sm:$0xff]
  %v260 = vld [vmem:[%s0 + $0x7b0] sm:$0xff]
  %v261 = vld [vmem:[%s0 + $0x7b8] sm:$0xff]
  %v262 = vld [vmem:[%s0 + $0x7c0] sm:$0xff]
  %v263 = vld [vmem:[%s0 + $0x7c8] sm:$0xff]
  %v264 = vld [vmem:[%s0 + $0x7d0] sm:$0xff]
  %v265 = vld [vmem:[%s0 + $0x7d8] sm:$0xff]
  %v266 = vld [vmem:[%s0 + $0x7e0] sm:$0xff]
  %v267 = vld [vmem:[%s0 + $0x7e8] sm:$0xff]
  %v268 = vld [vmem:[%s0 + $0x7f0] sm:$0xff]
  %v269 = vld [vmem:[%s0 + $0x7f8] sm:$0xff]
  %v270 = vld [vmem:[%s0 + $0x800] sm:$0xff]
  %v271 = vld [vmem:[%s0 + $0x808] sm:$0xff]
  %v272 = vld [vmem:[%s0 + $0x810] sm:$0xff]
  %v273 = vld [vmem:[%s0 + $0x818] sm:$0xff]
  %v274 = vld [vmem:[%s0 + $0x820] sm:$0xff]
  %v275 = vld [vmem:[%s0 + $0x828] sm:$0xff]
  %v276 = vld [vmem:[%s0 + $0x830] sm:$0xff]
  %v277 = vld [vmem:[%s0 + $0x838] sm:$0xff]
  %v278 = vld [vmem:[%s0 + $0x840] sm:$0xff]
  %v279 = vld [vmem:[%s0 + $0x848] sm:$0xff]
  %v280 = vld [vmem:[%s0 + $0x850] sm:$0xff]
  %v281 = vld [vmem:[%s0 + $0x858] sm:$0xff]
  %v282 = vld [vmem:[%s0 + $0x860] sm:$0xff]
  %v283 = vld [vmem:[%s0 + $0x868] sm:$0xff]
  %v284 = vld [vmem:[%s0 + $0x870] sm:$0xff]
  %v285 = vld [vmem:[%s0 + $0x878] sm:$0xff]
  %v286 = vld [vmem:[%s0 + $0x880] sm:$0xff]
  %v287 = vld [vmem:[%s0 + $0x888] sm:$0xff]
  %v288 = vld [vmem:[%s0 + $0x890] sm:$0xff]
  %v289 = vld [vmem:[%s0 + $0x898] sm:$0xff]
  %v290 = vld [vmem:[%s0 + $0x8a0] sm:$0xff]
  %v291 = vld [vmem:[%s0 + $0x8a8] sm:$0xff]
  %v292 = vld [vmem:[%s0 + $0x8b0] sm:$0xff]
  %v293 = vld [vmem:[%s0 + $0x8b8] sm:$0xff]
  %v294 = vld [vmem:[%s0 + $0x8c0] sm:$0xff]
  %v295 = vld [vmem:[%s0 + $0x8c8] sm:$0xff]
  %v296 = vld [vmem:[%s0 + $0x8d0] sm:$0xff]
  %v297 = vld [vmem:[%s0 + $0x8d8] sm:$0xff]
  %v298 = vld [vmem:[%s0 + $0x8e0] sm:$0xff]
  %v299 = vld [vmem:[%s0 + $0x8e8] sm:$0xff]
  %v300 = vld [vmem:[%s0 + $0x8f0] sm:$0xff]
  %v301 = vld [vmem:[%s0 + $0x8f8] sm:$0xff]
  %v302 = vld [vmem:[%s0 + $0x900] sm:$0xff]
  %v303 = vld [vmem:[%s0 + $0x908] sm:$0xff]
  %v304 = vld [vmem:[%s0 + $0x910] sm:$0xff]
  %v305 = vld [vmem:[%s0 + $0x918] sm:$0xff]
  %v306 = vld [vmem:[%s0 + $0x920] sm:$0xff]
  %v307 = vld [vmem:[%s0 + $0x928] sm:$0xff]
  %v308 = vld [vmem:[%s0 + $0x930] sm:$0xff]
  %v309 = vld [vmem:[%s0 + $0x938] sm:$0xff]
  %v310 = vld [vmem:[%s0 + $0x940] sm:$0xff]
  %v311 = vld [vmem:[%s0 + $0x948] sm:$0xff]
  %v312 = vld [vmem:[%s0 + $0x950] sm:$0xff]
  %v313 = vld [vmem:[%s0 + $0x958] sm:$0xff]
  %v314 = vld [vmem:[%s0 + $0x960] sm:$0xff]
  %v315 = vld [vmem:[%s0 + $0x968] sm:$0xff]
  %v316 = vld [vmem:[%s0 + $0x970] sm:$0xff]
  %v317 = vld [vmem:[%s0 + $0x978] sm:$0xff]
  %v318 = vld [vmem:[%s0 + $0x980] sm:$0xff]
  %v319 = vld [vmem:[%s0 + $0x988] sm:$0xff]
  %v320 = vld [vmem:[%s0 + $0x990] sm:$0xff]
  %v321 = vld [vmem:[%s0 + $0x998] sm:$0xff]
  %v322 = vld [vmem:[%s0 + $0x9a0] sm:$0xff]
  %v323 = vld [vmem:[%s0 + $0x9a8] sm:$0xff]
  %v324 = vld [vmem:[%s0 + $0x9b0] sm:$0xff]
  %v325 = vld [vmem:[%s0 + $0x9b8] sm:$0xff]
  %v326 = vld [vmem:[%s0 + $0x9c0] sm:$0xff]
  %v327 = vld [vmem:[%s0 + $0x9c8] sm:$0xff]
  %v328 = vld [vmem:[%s0 + $0x9d0] sm:$0xff]
  %v329 = vld [vmem:[%s0 + $0x9d8] sm:$0xff]
  %v330 = vld [vmem:[%s0 + $0x9e0] sm:$0xff]
  %v331 = vld [vmem:[%s0 + $0x9e8] sm:$0xff]
  %v332 = vld [vmem:[%s0 + $0x9f0] sm:$0xff]
  %v333 = vld [vmem:[%s0 + $0x9f8] sm:$0xff]
  %v334 = vld [vmem:[%s1] sm:$0xff]
  %v335 = vld [vmem:[%s1 + $0x8] sm:$0xff]
  %v336 = vld [vmem:[%s1 + $0x10] sm:$0xff]
  %v337 = vld [vmem:[%s1 + $0x18] sm:$0xff]
  %v338 = vld [vmem:[%s1 + $0x20] sm:$0xff]
  %v339 = vld [vmem:[%s1 + $0x28] sm:$0xff]
  %v340 = vld [vmem:[%s1 + $0x30] sm:$0xff]
  %v341 = vld [vmem:[%s1 + $0x38] sm:$0xff]
  %v342 = vld [vmem:[%s1 + $0x40] sm:$0xff]
  %v343 = vld [vmem:[%s1 + $0x48] sm:$0xff]
  %v344 = vld [vmem:[%s1 + $0x50] sm:$0xff]
  %v345 = vld [vmem:[%s1 + $0x58] sm:$0xff]
  %v346 = vld [vmem:[%s1 + $0x60] sm:$0xff]
  %v347 = vld [vmem:[%s1 + $0x68] sm:$0xff]
  %v348 = vld [vmem:[%s1 + $0x70] sm:$0xff]
  %v349 = vld [vmem:[%s1 + $0x78] sm:$0xff]
  %v350 = vld [vmem:[%s1 + $0x80] sm:$0xff]
  %v351 = vld [vmem:[%s1 + $0x88] sm:$0xff]
  %v352 = vld [vmem:[%s1 + $0x90] sm:$0xff]
  %v353 = vld [vmem:[%s1 + $0x98] sm:$0xff]
  %v354 = vld [vmem:[%s1 + $0xa0] sm:$0xff]
  %v355 = vld [vmem:[%s1 + $0xa8] sm:$0xff]
  %v356 = vld [vmem:[%s1 + $0xb0] sm:$0xff]
  %v357 = vld [vmem:[%s1 + $0xb8] sm:$0xff]
  %v358 = vld [vmem:[%s1 + $0xc0] sm:$0xff]
  %v359 = vld [vmem:[%s1 + $0xc8] sm:$0xff]
  %v360 = vld [vmem:[%s1 + $0xd0] sm:$0xff]
  %v361 = vld [vmem:[%s1 + $0xd8] sm:$0xff]
  %v362 = vld [vmem:[%s1 + $0xe0] sm:$0xff]
  %v363 = vld [vmem:[%s1 + $0xe8] sm:$0xff]
  %v364 = vld [vmem:[%s1 + $0xf0] sm:$0xff]
  %v365 = vld [vmem:[%s1 + $0xf8] sm:$0xff]
  %v366 = vld [vmem:[%s1 + $0x100] sm:$0xff]
  %v367 = vld [vmem:[%s1 + $0x108] sm:$0xff]
  %v368 = vld [vmem:[%s1 + $0x110] sm:$0xff]
  %v369 = vld [vmem:[%s1 + $0x118] sm:$0xff]
  %v370 = vld [vmem:[%s1 + $0x120] sm:$0xff]
  %v371 = vld [vmem:[%s1 + $0x128] sm:$0xff]
  %v372 = vld [vmem:[%s1 + $0x130] sm:$0xff]
  %v373 = vld [vmem:[%s1 + $0x138] sm:$0xff]
  %v374 = vld [vmem:[%s1 + $0x140] sm:$0xff]
  %v375 = vld [vmem:[%s1 + $0x148] sm:$0xff]
  %v376 = vld [vmem:[%s1 + $0x150] sm:$0xff]
  %v377 = vld [vmem:[%s1 + $0x158] sm:$0xff]
  %v378 = vld [vmem:[%s1 + $0x160] sm:$0xff]
  %v379 = vld [vmem:[%s1 + $0x168] sm:$0xff]
  %v380 = vld [vmem:[%s1 + $0x170] sm:$0xff]
  %v381 = vld [vmem:[%s1 + $0x178] sm:$0xff]
  %v382 = vld [vmem:[%s1 + $0x180] sm:$0xff]
  %v383 = vld [vmem:[%s1 + $0x188] sm:$0xff]
  %v384 = vld [vmem:[%s1 + $0x190] sm:$0xff]
  %v385 = vld [vmem:[%s1 + $0x198] sm:$0xff]
  %v386 = vld [vmem:[%s1 + $0x1a0] sm:$0xff]
  %v387 = vld [vmem:[%s1 + $0x1a8] sm:$0xff]
  %v388 = vld [vmem:[%s1 + $0x1b0] sm:$0xff]
  %v389 = vld [vmem:[%s1 + $0x1b8] sm:$0xff]
  %v390 = vld [vmem:[%s1 + $0x1c0] sm:$0xff]
  %v391 = vld [vmem:[%s1 + $0x1c8] sm:$0xff]
  %v392 = vld [vmem:[%s1 + $0x1d0] sm:$0xff]
  %v393 = vld [vmem:[%s1 + $0x1d8] sm:$0xff]
  %v394 = vld [vmem:[%s1 + $0x1e0] sm:$0xff]
  %v395 = vld [vmem:[%s1 + $0x1e8] sm:$0xff]
  %v396 = vld [vmem:[%s1 + $0x1f0] sm:$0xff]
  %v397 = vld [vmem:[%s1 + $0x1f8] sm:$0xff]
  %v398 = vld [vmem:[%s1 + $0x200] sm:$0xff]
  %v399 = vld [vmem:[%s1 + $0x208] sm:$0xff]
  %v400 = vld [vmem:[%s1 + $0x210] sm:$0xff]
  %v401 = vld [vmem:[%s1 + $0x218] sm:$0xff]
  %v402 = vld [vmem:[%s1 + $0x220] sm:$0xff]
  %v403 = vld [vmem:[%s1 + $0x228] sm:$0xff]
  %v404 = vld [vmem:[%s1 + $0x230] sm:$0xff]
  %v405 = vld [vmem:[%s1 + $0x238] sm:$0xff]
  %v406 = vld [vmem:[%s2] sm:$0x1]
  %v408 = vlaneseq
  %v409 = vshrl.u32 %v408, 7
  %v410 = vsub.s32 0, %v409
  %v411 = vrot.slane %v406, %v410
  %vm413 = vcmask 523264
  %v415 = vsel %vm413, %v18, 0
  %v418 = vsel %vm413, %v23, 0
  %v421 = vsel %vm413, %v28, 0
  %v424 = vsel %vm413, %v33, 0
  %v427 = vsel %vm413, %v38, 0
  %v430 = vsel %vm413, %v43, 0
  %v433 = vsel %vm413, %v48, 0
  %v436 = vsel %vm413, %v53, 0
  %v439 = vsel %vm413, %v58, 0
  %v442 = vsel %vm413, %v63, 0
  %v445 = vsel %vm413, %v68, 0
  %v448 = vsel %vm413, %v73, 0
  %v451 = vsel %vm413, %v78, 0
  %v454 = vsel %vm413, %v83, 0
  %v457 = vsel %vm413, %v88, 0
  %v460 = vsel %vm413, %v93, 0
  %v463 = vsel %vm413, %v98, 0
  %v466 = vsel %vm413, %v103, 0
  %v469 = vsel %vm413, %v108, 0
  %v472 = vsel %vm413, %v113, 0
  %v475 = vsel %vm413, %v118, 0
  %v478 = vsel %vm413, %v123, 0
  %v481 = vsel %vm413, %v128, 0
  %v484 = vsel %vm413, %v133, 0
  %v487 = vsel %vm413, %v138, 0
  %v490 = vsel %vm413, %v143, 0
  %v493 = vsel %vm413, %v148, 0
  %v496 = vsel %vm413, %v153, 0
  %v499 = vsel %vm413, %v158, 0
  %v502 = vsel %vm413, %v163, 0
  %v505 = vsel %vm413, %v168, 0
  %v508 = vsel %vm413, %v173, 0
  %v511 = vsel %vm413, %v178, 0
  %v514 = vsel %vm413, %v183, 0
  %v517 = vsel %vm413, %v188, 0
  %v520 = vsel %vm413, %v193, 0
  %v523 = vsel %vm413, %v198, 0
  %v526 = vsel %vm413, %v203, 0
  %v529 = vsel %vm413, %v208, 0
  %v532 = vsel %vm413, %v213, 0
  %v535 = vsel %vm413, %v218, 0
  %v538 = vsel %vm413, %v223, 0
  %v541 = vsel %vm413, %v228, 0
  %v544 = vsel %vm413, %v233, 0
  %v547 = vsel %vm413, %v238, 0
  %v550 = vsel %vm413, %v243, 0
  %v553 = vsel %vm413, %v248, 0
  %v556 = vsel %vm413, %v253, 0
  %v559 = vsel %vm413, %v258, 0
  %v562 = vsel %vm413, %v263, 0
  %v565 = vsel %vm413, %v268, 0
  %v568 = vsel %vm413, %v273, 0
  %v571 = vsel %vm413, %v278, 0
  %v574 = vsel %vm413, %v283, 0
  %v577 = vsel %vm413, %v288, 0
  %v580 = vsel %vm413, %v293, 0
  %v583 = vsel %vm413, %v298, 0
  %v586 = vsel %vm413, %v303, 0
  %v589 = vsel %vm413, %v308, 0
  %v592 = vsel %vm413, %v313, 0
  %v595 = vsel %vm413, %v318, 0
  %v598 = vsel %vm413, %v323, 0
  %v601 = vsel %vm413, %v328, 0
  %v604 = vsel %vm413, %v333, 0
  %606 = vmatprep.subr.mxu0 0.0
  %607 = vmatpush1.msra.mxu0 %v349
  %608 = vmatprep.subr.mxu0 0.0
  %609 = vmatpush1.msra.mxu0 %v348
  %610 = vmatprep.subr.mxu0 0.0
  %611 = vmatpush1.msra.mxu0 %v347
  %612 = vmatprep.subr.mxu0 0.0
  %613 = vmatpush1.msra.mxu0 %v346
  %614 = vmatprep.subr.mxu0 0.0
  %615 = vmatpush1.msra.mxu0 %v345
  %616 = vmatprep.subr.mxu0 0.0
  %617 = vmatpush1.msra.mxu0 %v344
  %618 = vmatprep.subr.mxu0 0.0
  %619 = vmatpush1.msra.mxu0 %v343
  %620 = vmatprep.subr.mxu0 0.0
  %621 = vmatpush1.msra.mxu0 %v342
  %622 = vmatprep.subr.mxu0 0.0
  %623 = vmatpush1.msra.mxu0 %v341
  %624 = vmatprep.subr.mxu0 0.0
  %625 = vmatpush1.msra.mxu0 %v340
  %626 = vmatprep.subr.mxu0 0.0
  %627 = vmatpush1.msra.mxu0 %v339
  %628 = vmatprep.subr.mxu0 0.0
  %629 = vmatpush1.msra.mxu0 %v338
  %630 = vmatprep.subr.mxu0 0.0
  %631 = vmatpush1.msra.mxu0 %v337
  %632 = vmatprep.subr.mxu0 0.0
  %633 = vmatpush1.msra.mxu0 %v336
  %634 = vmatprep.subr.mxu0 0.0
  %635 = vmatpush1.msra.mxu0 %v335
  %636 = vmatprep.subr.mxu0 0.0
  %637 = vmatpush1.msra.mxu0 %v334
  %638 = vmatprep.subr.mxu0 0.0
  %639 = vmatpush2.msra.mxu0 %v365
  %640 = vmatprep.subr.mxu0 0.0
  %641 = vmatpush2.msra.mxu0 %v364
  %642 = vmatprep.subr.mxu0 0.0
  %643 = vmatpush2.msra.mxu0 %v363
  %644 = vmatprep.subr.mxu0 0.0
  %645 = vmatpush2.msra.mxu0 %v362
  %646 = vmatprep.subr.mxu0 0.0
  %647 = vmatpush2.msra.mxu0 %v361
  %648 = vmatprep.subr.mxu0 0.0
  %649 = vmatpush2.msra.mxu0 %v360
  %650 = vmatprep.subr.mxu0 0.0
  %651 = vmatpush2.msra.mxu0 %v359
  %652 = vmatprep.subr.mxu0 0.0
  %653 = vmatpush2.msra.mxu0 %v358
  %654 = vmatprep.subr.mxu0 0.0
  %655 = vmatpush2.msra.mxu0 %v357
  %656 = vmatprep.subr.mxu0 0.0
  %657 = vmatpush2.msra.mxu0 %v356
  %658 = vmatprep.subr.mxu0 0.0
  %659 = vmatpush2.msra.mxu0 %v355
  %660 = vmatprep.subr.mxu0 0.0
  %661 = vmatpush2.msra.mxu0 %v354
  %662 = vmatprep.subr.mxu0 0.0
  %663 = vmatpush2.msra.mxu0 %v353
  %664 = vmatprep.subr.mxu0 0.0
  %665 = vmatpush2.msra.mxu0 %v352
  %666 = vmatprep.subr.mxu0 0.0
  %667 = vmatpush2.msra.mxu0 %v351
  %668 = vmatprep.subr.mxu0 0.0
  %669 = vmatpush2.msra.mxu0 %v350
  %670 = vmatprep.mubr.f32.mxu0 %v15
  %671 = vmatmul.mubr.f32.gmra.mxu0 %v14
  %v672 = vpop.f32.mrf.mxu0
  %v673 = vadd.f32 %v411, %v672
  %v674 = vpop.f32.mrf.mxu0
  %675 = vmatprep.mubr.f32.mxu0 %v20
  %676 = vmatmul.mubr.f32.gmra.mxu0 %v19
  %v677 = vpop.f32.mrf.mxu0
  %v678 = vadd.f32 %v411, %v677
  %v679 = vpop.f32.mrf.mxu0
  %680 = vmatprep.mubr.f32.mxu0 %v25
  %681 = vmatmul.mubr.f32.gmra.mxu0 %v24
  %v682 = vpop.f32.mrf.mxu0
  %v683 = vadd.f32 %v411, %v682
  %v684 = vpop.f32.mrf.mxu0
  %685 = vmatprep.mubr.f32.mxu0 %v30
  %686 = vmatmul.mubr.f32.gmra.mxu0 %v29
  %v687 = vpop.f32.mrf.mxu0
  %v688 = vadd.f32 %v411, %v687
  %v689 = vpop.f32.mrf.mxu0
  %690 = vmatprep.mubr.f32.mxu0 %v35
  %691 = vmatmul.mubr.f32.gmra.mxu0 %v34
  %v692 = vpop.f32.mrf.mxu0
  %v693 = vadd.f32 %v411, %v692
  %v694 = vpop.f32.mrf.mxu0
  %695 = vmatprep.mubr.f32.mxu0 %v40
  %696 = vmatmul.mubr.f32.gmra.mxu0 %v39
  %v697 = vpop.f32.mrf.mxu0
  %v698 = vadd.f32 %v411, %v697
  %v699 = vpop.f32.mrf.mxu0
  %700 = vmatprep.mubr.f32.mxu0 %v45
  %701 = vmatmul.mubr.f32.gmra.mxu0 %v44
  %v702 = vpop.f32.mrf.mxu0
  %v703 = vadd.f32 %v411, %v702
  %v704 = vpop.f32.mrf.mxu0
  %705 = vmatprep.mubr.f32.mxu0 %v50
  %706 = vmatmul.mubr.f32.gmra.mxu0 %v49
  %v707 = vpop.f32.mrf.mxu0
  %v708 = vadd.f32 %v411, %v707
  %v709 = vpop.f32.mrf.mxu0
  %710 = vmatprep.mubr.f32.mxu0 %v55
  %711 = vmatmul.mubr.f32.gmra.mxu0 %v54
  %v712 = vpop.f32.mrf.mxu0
  %v713 = vadd.f32 %v411, %v712
  %v714 = vpop.f32.mrf.mxu0
  %715 = vmatprep.mubr.f32.mxu0 %v60
  %716 = vmatmul.mubr.f32.gmra.mxu0 %v59
  %v717 = vpop.f32.mrf.mxu0
  %v718 = vadd.f32 %v411, %v717
  %v719 = vpop.f32.mrf.mxu0
  %720 = vmatprep.mubr.f32.mxu0 %v65
  %721 = vmatmul.mubr.f32.gmra.mxu0 %v64
  %v722 = vpop.f32.mrf.mxu0
  %v723 = vadd.f32 %v411, %v722
  %v724 = vpop.f32.mrf.mxu0
  %725 = vmatprep.mubr.f32.mxu0 %v70
  %726 = vmatmul.mubr.f32.gmra.mxu0 %v69
  %v727 = vpop.f32.mrf.mxu0
  %v728 = vadd.f32 %v411, %v727
  %v729 = vpop.f32.mrf.mxu0
  %730 = vmatprep.mubr.f32.mxu0 %v75
  %731 = vmatmul.mubr.f32.gmra.mxu0 %v74
  %v732 = vpop.f32.mrf.mxu0
  %v733 = vadd.f32 %v411, %v732
  %v734 = vpop.f32.mrf.mxu0
  %735 = vmatprep.mubr.f32.mxu0 %v80
  %736 = vmatmul.mubr.f32.gmra.mxu0 %v79
  %v737 = vpop.f32.mrf.mxu0
  %v738 = vadd.f32 %v411, %v737
  %v739 = vpop.f32.mrf.mxu0
  %740 = vmatprep.mubr.f32.mxu0 %v85
  %741 = vmatmul.mubr.f32.gmra.mxu0 %v84
  %v742 = vpop.f32.mrf.mxu0
  %v743 = vadd.f32 %v411, %v742
  %v744 = vpop.f32.mrf.mxu0
  %745 = vmatprep.mubr.f32.mxu0 %v90
  %746 = vmatmul.mubr.f32.gmra.mxu0 %v89
  %v747 = vpop.f32.mrf.mxu0
  %v748 = vadd.f32 %v411, %v747
  %v749 = vpop.f32.mrf.mxu0
  %750 = vmatprep.mubr.f32.mxu0 %v95
  %751 = vmatmul.mubr.f32.gmra.mxu0 %v94
  %v752 = vpop.f32.mrf.mxu0
  %v753 = vadd.f32 %v411, %v752
  %v754 = vpop.f32.mrf.mxu0
  %755 = vmatprep.mubr.f32.mxu0 %v100
  %756 = vmatmul.mubr.f32.gmra.mxu0 %v99
  %v757 = vpop.f32.mrf.mxu0
  %v758 = vadd.f32 %v411, %v757
  %v759 = vpop.f32.mrf.mxu0
  %760 = vmatprep.mubr.f32.mxu0 %v105
  %761 = vmatmul.mubr.f32.gmra.mxu0 %v104
  %v762 = vpop.f32.mrf.mxu0
  %v763 = vadd.f32 %v411, %v762
  %v764 = vpop.f32.mrf.mxu0
  %765 = vmatprep.mubr.f32.mxu0 %v110
  %766 = vmatmul.mubr.f32.gmra.mxu0 %v109
  %v767 = vpop.f32.mrf.mxu0
  %v768 = vadd.f32 %v411, %v767
  %v769 = vpop.f32.mrf.mxu0
  %770 = vmatprep.mubr.f32.mxu0 %v115
  %771 = vmatmul.mubr.f32.gmra.mxu0 %v114
  %v772 = vpop.f32.mrf.mxu0
  %v773 = vadd.f32 %v411, %v772
  %v774 = vpop.f32.mrf.mxu0
  %775 = vmatprep.mubr.f32.mxu0 %v120
  %776 = vmatmul.mubr.f32.gmra.mxu0 %v119
  %v777 = vpop.f32.mrf.mxu0
  %v778 = vadd.f32 %v411, %v777
  %v779 = vpop.f32.mrf.mxu0
  %780 = vmatprep.mubr.f32.mxu0 %v125
  %781 = vmatmul.mubr.f32.gmra.mxu0 %v124
  %v782 = vpop.f32.mrf.mxu0
  %v783 = vadd.f32 %v411, %v782
  %v784 = vpop.f32.mrf.mxu0
  %785 = vmatprep.mubr.f32.mxu0 %v130
  %786 = vmatmul.mubr.f32.gmra.mxu0 %v129
  %v787 = vpop.f32.mrf.mxu0
  %v788 = vadd.f32 %v411, %v787
  %v789 = vpop.f32.mrf.mxu0
  %790 = vmatprep.mubr.f32.mxu0 %v135
  %791 = vmatmul.mubr.f32.gmra.mxu0 %v134
  %v792 = vpop.f32.mrf.mxu0
  %v793 = vadd.f32 %v411, %v792
  %v794 = vpop.f32.mrf.mxu0
  %795 = vmatprep.mubr.f32.mxu0 %v140
  %796 = vmatmul.mubr.f32.gmra.mxu0 %v139
  %v797 = vpop.f32.mrf.mxu0
  %v798 = vadd.f32 %v411, %v797
  %v799 = vpop.f32.mrf.mxu0
  %800 = vmatprep.mubr.f32.mxu0 %v145
  %801 = vmatmul.mubr.f32.gmra.mxu0 %v144
  %v802 = vpop.f32.mrf.mxu0
  %v803 = vadd.f32 %v411, %v802
  %v804 = vpop.f32.mrf.mxu0
  %805 = vmatprep.mubr.f32.mxu0 %v150
  %806 = vmatmul.mubr.f32.gmra.mxu0 %v149
  %v807 = vpop.f32.mrf.mxu0
  %v808 = vadd.f32 %v411, %v807
  %v809 = vpop.f32.mrf.mxu0
  %810 = vmatprep.mubr.f32.mxu0 %v155
  %811 = vmatmul.mubr.f32.gmra.mxu0 %v154
  %v812 = vpop.f32.mrf.mxu0
  %v813 = vadd.f32 %v411, %v812
  %v814 = vpop.f32.mrf.mxu0
  %815 = vmatprep.mubr.f32.mxu0 %v160
  %816 = vmatmul.mubr.f32.gmra.mxu0 %v159
  %v817 = vpop.f32.mrf.mxu0
  %v818 = vadd.f32 %v411, %v817
  %v819 = vpop.f32.mrf.mxu0
  %820 = vmatprep.mubr.f32.mxu0 %v165
  %821 = vmatmul.mubr.f32.gmra.mxu0 %v164
  %v822 = vpop.f32.mrf.mxu0
  %v823 = vadd.f32 %v411, %v822
  %v824 = vpop.f32.mrf.mxu0
  %825 = vmatprep.mubr.f32.mxu0 %v170
  %826 = vmatmul.mubr.f32.gmra.mxu0 %v169
  %v827 = vpop.f32.mrf.mxu0
  %v828 = vadd.f32 %v411, %v827
  %v829 = vpop.f32.mrf.mxu0
  %830 = vmatprep.mubr.f32.mxu0 %v175
  %831 = vmatmul.mubr.f32.gmra.mxu0 %v174
  %v832 = vpop.f32.mrf.mxu0
  %v833 = vadd.f32 %v411, %v832
  %v834 = vpop.f32.mrf.mxu0
  %835 = vmatprep.mubr.f32.mxu0 %v180
  %836 = vmatmul.mubr.f32.gmra.mxu0 %v179
  %v837 = vpop.f32.mrf.mxu0
  %v838 = vadd.f32 %v411, %v837
  %v839 = vpop.f32.mrf.mxu0
  %840 = vmatprep.mubr.f32.mxu0 %v185
  %841 = vmatmul.mubr.f32.gmra.mxu0 %v184
  %v842 = vpop.f32.mrf.mxu0
  %v843 = vadd.f32 %v411, %v842
  %v844 = vpop.f32.mrf.mxu0
  %845 = vmatprep.mubr.f32.mxu0 %v190
  %846 = vmatmul.mubr.f32.gmra.mxu0 %v189
  %v847 = vpop.f32.mrf.mxu0
  %v848 = vadd.f32 %v411, %v847
  %v849 = vpop.f32.mrf.mxu0
  %850 = vmatprep.mubr.f32.mxu0 %v195
  %851 = vmatmul.mubr.f32.gmra.mxu0 %v194
  %v852 = vpop.f32.mrf.mxu0
  %v853 = vadd.f32 %v411, %v852
  %v854 = vpop.f32.mrf.mxu0
  %855 = vmatprep.mubr.f32.mxu0 %v200
  %856 = vmatmul.mubr.f32.gmra.mxu0 %v199
  %v857 = vpop.f32.mrf.mxu0
  %v858 = vadd.f32 %v411, %v857
  %v859 = vpop.f32.mrf.mxu0
  %860 = vmatprep.mubr.f32.mxu0 %v205
  %861 = vmatmul.mubr.f32.gmra.mxu0 %v204
  %v862 = vpop.f32.mrf.mxu0
  %v863 = vadd.f32 %v411, %v862
  %v864 = vpop.f32.mrf.mxu0
  %865 = vmatprep.mubr.f32.mxu0 %v210
  %866 = vmatmul.mubr.f32.gmra.mxu0 %v209
  %v867 = vpop.f32.mrf.mxu0
  %v868 = vadd.f32 %v411, %v867
  %v869 = vpop.f32.mrf.mxu0
  %870 = vmatprep.mubr.f32.mxu0 %v215
  %871 = vmatmul.mubr.f32.gmra.mxu0 %v214
  %v872 = vpop.f32.mrf.mxu0
  %v873 = vadd.f32 %v411, %v872
  %v874 = vpop.f32.mrf.mxu0
  %875 = vmatprep.mubr.f32.mxu0 %v220
  %876 = vmatmul.mubr.f32.gmra.mxu0 %v219
  %v877 = vpop.f32.mrf.mxu0
  %v878 = vadd.f32 %v411, %v877
  %v879 = vpop.f32.mrf.mxu0
  %880 = vmatprep.mubr.f32.mxu0 %v225
  %881 = vmatmul.mubr.f32.gmra.mxu0 %v224
  %v882 = vpop.f32.mrf.mxu0
  %v883 = vadd.f32 %v411, %v882
  %v884 = vpop.f32.mrf.mxu0
  %885 = vmatprep.mubr.f32.mxu0 %v230
  %886 = vmatmul.mubr.f32.gmra.mxu0 %v229
  %v887 = vpop.f32.mrf.mxu0
  %v888 = vadd.f32 %v411, %v887
  %v889 = vpop.f32.mrf.mxu0
  %890 = vmatprep.mubr.f32.mxu0 %v235
  %891 = vmatmul.mubr.f32.gmra.mxu0 %v234
  %v892 = vpop.f32.mrf.mxu0
  %v893 = vadd.f32 %v411, %v892
  %v894 = vpop.f32.mrf.mxu0
  %895 = vmatprep.mubr.f32.mxu0 %v240
  %896 = vmatmul.mubr.f32.gmra.mxu0 %v239
  %v897 = vpop.f32.mrf.mxu0
  %v898 = vadd.f32 %v411, %v897
  %v899 = vpop.f32.mrf.mxu0
  %900 = vmatprep.mubr.f32.mxu0 %v245
  %901 = vmatmul.mubr.f32.gmra.mxu0 %v244
  %v902 = vpop.f32.mrf.mxu0
  %v903 = vadd.f32 %v411, %v902
  %v904 = vpop.f32.mrf.mxu0
  %905 = vmatprep.mubr.f32.mxu0 %v250
  %906 = vmatmul.mubr.f32.gmra.mxu0 %v249
  %v907 = vpop.f32.mrf.mxu0
  %v908 = vadd.f32 %v411, %v907
  %v909 = vpop.f32.mrf.mxu0
  %910 = vmatprep.mubr.f32.mxu0 %v255
  %911 = vmatmul.mubr.f32.gmra.mxu0 %v254
  %v912 = vpop.f32.mrf.mxu0
  %v913 = vadd.f32 %v411, %v912
  %v914 = vpop.f32.mrf.mxu0
  %915 = vmatprep.mubr.f32.mxu0 %v260
  %916 = vmatmul.mubr.f32.gmra.mxu0 %v259
  %v917 = vpop.f32.mrf.mxu0
  %v918 = vadd.f32 %v411, %v917
  %v919 = vpop.f32.mrf.mxu0
  %920 = vmatprep.mubr.f32.mxu0 %v265
  %921 = vmatmul.mubr.f32.gmra.mxu0 %v264
  %v922 = vpop.f32.mrf.mxu0
  %v923 = vadd.f32 %v411, %v922
  %v924 = vpop.f32.mrf.mxu0
  %925 = vmatprep.mubr.f32.mxu0 %v270
  %926 = vmatmul.mubr.f32.gmra.mxu0 %v269
  %v927 = vpop.f32.mrf.mxu0
  %v928 = vadd.f32 %v411, %v927
  %v929 = vpop.f32.mrf.mxu0
  %930 = vmatprep.mubr.f32.mxu0 %v275
  %931 = vmatmul.mubr.f32.gmra.mxu0 %v274
  %v932 = vpop.f32.mrf.mxu0
  %v933 = vadd.f32 %v411, %v932
  %v934 = vpop.f32.mrf.mxu0
  %935 = vmatprep.mubr.f32.mxu0 %v280
  %936 = vmatmul.mubr.f32.gmra.mxu0 %v279
  %v937 = vpop.f32.mrf.mxu0
  %v938 = vadd.f32 %v411, %v937
  %v939 = vpop.f32.mrf.mxu0
  %940 = vmatprep.mubr.f32.mxu0 %v285
  %941 = vmatmul.mubr.f32.gmra.mxu0 %v284
  %v942 = vpop.f32.mrf.mxu0
  %v943 = vadd.f32 %v411, %v942
  %v944 = vpop.f32.mrf.mxu0
  %945 = vmatprep.mubr.f32.mxu0 %v290
  %946 = vmatmul.mubr.f32.gmra.mxu0 %v289
  %v947 = vpop.f32.mrf.mxu0
  %v948 = vadd.f32 %v411, %v947
  %v949 = vpop.f32.mrf.mxu0
  %950 = vmatprep.mubr.f32.mxu0 %v295
  %951 = vmatmul.mubr.f32.gmra.mxu0 %v294
  %v952 = vpop.f32.mrf.mxu0
  %v953 = vadd.f32 %v411, %v952
  %v954 = vpop.f32.mrf.mxu0
  %955 = vmatprep.mubr.f32.mxu0 %v300
  %956 = vmatmul.mubr.f32.gmra.mxu0 %v299
  %v957 = vpop.f32.mrf.mxu0
  %v958 = vadd.f32 %v411, %v957
  %v959 = vpop.f32.mrf.mxu0
  %960 = vmatprep.mubr.f32.mxu0 %v305
  %961 = vmatmul.mubr.f32.gmra.mxu0 %v304
  %v962 = vpop.f32.mrf.mxu0
  %v963 = vadd.f32 %v411, %v962
  %v964 = vpop.f32.mrf.mxu0
  %965 = vmatprep.mubr.f32.mxu0 %v310
  %966 = vmatmul.mubr.f32.gmra.mxu0 %v309
  %v967 = vpop.f32.mrf.mxu0
  %v968 = vadd.f32 %v411, %v967
  %v969 = vpop.f32.mrf.mxu0
  %970 = vmatprep.mubr.f32.mxu0 %v315
  %971 = vmatmul.mubr.f32.gmra.mxu0 %v314
  %v972 = vpop.f32.mrf.mxu0
  %v973 = vadd.f32 %v411, %v972
  %v974 = vpop.f32.mrf.mxu0
  %975 = vmatprep.mubr.f32.mxu0 %v320
  %976 = vmatmul.mubr.f32.gmra.mxu0 %v319
  %v977 = vpop.f32.mrf.mxu0
  %v978 = vadd.f32 %v411, %v977
  %v979 = vpop.f32.mrf.mxu0
  %980 = vmatprep.mubr.f32.mxu0 %v325
  %981 = vmatmul.mubr.f32.gmra.mxu0 %v324
  %v982 = vpop.f32.mrf.mxu0
  %v983 = vadd.f32 %v411, %v982
  %v984 = vpop.f32.mrf.mxu0
  %985 = vmatprep.mubr.f32.mxu0 %v330
  %986 = vmatmul.mubr.f32.gmra.mxu0 %v329
  %v987 = vpop.f32.mrf.mxu0
  %v988 = vadd.f32 %v411, %v987
  %v989 = vpop.f32.mrf.mxu0
  %990 = vdwg.mxu0
  %991 = vmatprep.subr.mxu0 0.0
  %992 = vmatpush1.msra.mxu0 %v381
  %993 = vmatprep.subr.mxu0 0.0
  %994 = vmatpush1.msra.mxu0 %v380
  %995 = vmatprep.subr.mxu0 0.0
  %996 = vmatpush1.msra.mxu0 %v379
  %997 = vmatprep.subr.mxu0 0.0
  %998 = vmatpush1.msra.mxu0 %v378
  %999 = vmatprep.subr.mxu0 0.0
  %1000 = vmatpush1.msra.mxu0 %v377
  %1001 = vmatprep.subr.mxu0 0.0
  %1002 = vmatpush1.msra.mxu0 %v376
  %1003 = vmatprep.subr.mxu0 0.0
  %1004 = vmatpush1.msra.mxu0 %v375
  %1005 = vmatprep.subr.mxu0 0.0
  %1006 = vmatpush1.msra.mxu0 %v374
  %1007 = vmatprep.subr.mxu0 0.0
  %1008 = vmatpush1.msra.mxu0 %v373
  %1009 = vmatprep.subr.mxu0 0.0
  %1010 = vmatpush1.msra.mxu0 %v372
  %1011 = vmatprep.subr.mxu0 0.0
  %1012 = vmatpush1.msra.mxu0 %v371
  %1013 = vmatprep.subr.mxu0 0.0
  %1014 = vmatpush1.msra.mxu0 %v370
  %1015 = vmatprep.subr.mxu0 0.0
  %1016 = vmatpush1.msra.mxu0 %v369
  %1017 = vmatprep.subr.mxu0 0.0
  %1018 = vmatpush1.msra.mxu0 %v368
  %1019 = vmatprep.subr.mxu0 0.0
  %1020 = vmatpush1.msra.mxu0 %v367
  %1021 = vmatprep.subr.mxu0 0.0
  %1022 = vmatpush1.msra.mxu0 %v366
  %1023 = vmatprep.subr.mxu0 0.0
  %1024 = vmatpush2.msra.mxu0 %v397
  %1025 = vmatprep.subr.mxu0 0.0
  %1026 = vmatpush2.msra.mxu0 %v396
  %1027 = vmatprep.subr.mxu0 0.0
  %1028 = vmatpush2.msra.mxu0 %v395
  %1029 = vmatprep.subr.mxu0 0.0
  %1030 = vmatpush2.msra.mxu0 %v394
  %1031 = vmatprep.subr.mxu0 0.0
  %1032 = vmatpush2.msra.mxu0 %v393
  %1033 = vmatprep.subr.mxu0 0.0
  %1034 = vmatpush2.msra.mxu0 %v392
  %1035 = vmatprep.subr.mxu0 0.0
  %1036 = vmatpush2.msra.mxu0 %v391
  %1037 = vmatprep.subr.mxu0 0.0
  %1038 = vmatpush2.msra.mxu0 %v390
  %1039 = vmatprep.subr.mxu0 0.0
  %1040 = vmatpush2.msra.mxu0 %v389
  %1041 = vmatprep.subr.mxu0 0.0
  %1042 = vmatpush2.msra.mxu0 %v388
  %1043 = vmatprep.subr.mxu0 0.0
  %1044 = vmatpush2.msra.mxu0 %v387
  %1045 = vmatprep.subr.mxu0 0.0
  %1046 = vmatpush2.msra.mxu0 %v386
  %1047 = vmatprep.subr.mxu0 0.0
  %1048 = vmatpush2.msra.mxu0 %v385
  %1049 = vmatprep.subr.mxu0 0.0
  %1050 = vmatpush2.msra.mxu0 %v384
  %1051 = vmatprep.subr.mxu0 0.0
  %1052 = vmatpush2.msra.mxu0 %v383
  %1053 = vmatprep.subr.mxu0 0.0
  %1054 = vmatpush2.msra.mxu0 %v382
  %1055 = vmatprep.mubr.f32.mxu0 %v17
  %1056 = vmatmul.mubr.f32.gmra.mxu0 %v16
  %v1057 = vpop.f32.mrf.mxu0
  %v1058 = vadd.f32 %v673, %v1057
  %v1059 = vpop.f32.mrf.mxu0
  %1060 = vmatprep.mubr.f32.mxu0 %v22
  %1061 = vmatmul.mubr.f32.gmra.mxu0 %v21
  %v1062 = vpop.f32.mrf.mxu0
  %v1063 = vadd.f32 %v678, %v1062
  %v1064 = vpop.f32.mrf.mxu0
  %1065 = vmatprep.mubr.f32.mxu0 %v27
  %1066 = vmatmul.mubr.f32.gmra.mxu0 %v26
  %v1067 = vpop.f32.mrf.mxu0
  %v1068 = vadd.f32 %v683, %v1067
  %v1069 = vpop.f32.mrf.mxu0
  %1070 = vmatprep.mubr.f32.mxu0 %v32
  %1071 = vmatmul.mubr.f32.gmra.mxu0 %v31
  %v1072 = vpop.f32.mrf.mxu0
  %v1073 = vadd.f32 %v688, %v1072
  %v1074 = vpop.f32.mrf.mxu0
  %1075 = vmatprep.mubr.f32.mxu0 %v37
  %1076 = vmatmul.mubr.f32.gmra.mxu0 %v36
  %v1077 = vpop.f32.mrf.mxu0
  %v1078 = vadd.f32 %v693, %v1077
  %v1079 = vpop.f32.mrf.mxu0
  %1080 = vmatprep.mubr.f32.mxu0 %v42
  %1081 = vmatmul.mubr.f32.gmra.mxu0 %v41
  %v1082 = vpop.f32.mrf.mxu0
  %v1083 = vadd.f32 %v698, %v1082
  %v1084 = vpop.f32.mrf.mxu0
  %1085 = vmatprep.mubr.f32.mxu0 %v47
  %1086 = vmatmul.mubr.f32.gmra.mxu0 %v46
  %v1087 = vpop.f32.mrf.mxu0
  %v1088 = vadd.f32 %v703, %v1087
  %v1089 = vpop.f32.mrf.mxu0
  %1090 = vmatprep.mubr.f32.mxu0 %v52
  %1091 = vmatmul.mubr.f32.gmra.mxu0 %v51
  %v1092 = vpop.f32.mrf.mxu0
  %v1093 = vadd.f32 %v708, %v1092
  %v1094 = vpop.f32.mrf.mxu0
  %1095 = vmatprep.mubr.f32.mxu0 %v57
  %1096 = vmatmul.mubr.f32.gmra.mxu0 %v56
  %v1097 = vpop.f32.mrf.mxu0
  %v1098 = vadd.f32 %v713, %v1097
  %v1099 = vpop.f32.mrf.mxu0
  %1100 = vmatprep.mubr.f32.mxu0 %v62
  %1101 = vmatmul.mubr.f32.gmra.mxu0 %v61
  %v1102 = vpop.f32.mrf.mxu0
  %v1103 = vadd.f32 %v718, %v1102
  %v1104 = vpop.f32.mrf.mxu0
  %1105 = vmatprep.mubr.f32.mxu0 %v67
  %1106 = vmatmul.mubr.f32.gmra.mxu0 %v66
  %v1107 = vpop.f32.mrf.mxu0
  %v1108 = vadd.f32 %v723, %v1107
  %v1109 = vpop.f32.mrf.mxu0
  %1110 = vmatprep.mubr.f32.mxu0 %v72
  %1111 = vmatmul.mubr.f32.gmra.mxu0 %v71
  %v1112 = vpop.f32.mrf.mxu0
  %v1113 = vadd.f32 %v728, %v1112
  %v1114 = vpop.f32.mrf.mxu0
  %1115 = vmatprep.mubr.f32.mxu0 %v77
  %1116 = vmatmul.mubr.f32.gmra.mxu0 %v76
  %v1117 = vpop.f32.mrf.mxu0
  %v1118 = vadd.f32 %v733, %v1117
  %v1119 = vpop.f32.mrf.mxu0
  %1120 = vmatprep.mubr.f32.mxu0 %v82
  %1121 = vmatmul.mubr.f32.gmra.mxu0 %v81
  %v1122 = vpop.f32.mrf.mxu0
  %v1123 = vadd.f32 %v738, %v1122
  %v1124 = vpop.f32.mrf.mxu0
  %1125 = vmatprep.mubr.f32.mxu0 %v87
  %1126 = vmatmul.mubr.f32.gmra.mxu0 %v86
  %v1127 = vpop.f32.mrf.mxu0
  %v1128 = vadd.f32 %v743, %v1127
  %v1129 = vpop.f32.mrf.mxu0
  %1130 = vmatprep.mubr.f32.mxu0 %v92
  %1131 = vmatmul.mubr.f32.gmra.mxu0 %v91
  %v1132 = vpop.f32.mrf.mxu0
  %v1133 = vadd.f32 %v748, %v1132
  %v1134 = vpop.f32.mrf.mxu0
  %1135 = vmatprep.mubr.f32.mxu0 %v97
  %1136 = vmatmul.mubr.f32.gmra.mxu0 %v96
  %v1137 = vpop.f32.mrf.mxu0
  %v1138 = vadd.f32 %v753, %v1137
  %v1139 = vpop.f32.mrf.mxu0
  %1140 = vmatprep.mubr.f32.mxu0 %v102
  %1141 = vmatmul.mubr.f32.gmra.mxu0 %v101
  %v1142 = vpop.f32.mrf.mxu0
  %v1143 = vadd.f32 %v758, %v1142
  %v1144 = vpop.f32.mrf.mxu0
  %1145 = vmatprep.mubr.f32.mxu0 %v107
  %1146 = vmatmul.mubr.f32.gmra.mxu0 %v106
  %v1147 = vpop.f32.mrf.mxu0
  %v1148 = vadd.f32 %v763, %v1147
  %v1149 = vpop.f32.mrf.mxu0
  %1150 = vmatprep.mubr.f32.mxu0 %v112
  %1151 = vmatmul.mubr.f32.gmra.mxu0 %v111
  %v1152 = vpop.f32.mrf.mxu0
  %v1153 = vadd.f32 %v768, %v1152
  %v1154 = vpop.f32.mrf.mxu0
  %1155 = vmatprep.mubr.f32.mxu0 %v117
  %1156 = vmatmul.mubr.f32.gmra.mxu0 %v116
  %v1157 = vpop.f32.mrf.mxu0
  %v1158 = vadd.f32 %v773, %v1157
  %v1159 = vpop.f32.mrf.mxu0
  %1160 = vmatprep.mubr.f32.mxu0 %v122
  %1161 = vmatmul.mubr.f32.gmra.mxu0 %v121
  %v1162 = vpop.f32.mrf.mxu0
  %v1163 = vadd.f32 %v778, %v1162
  %v1164 = vpop.f32.mrf.mxu0
  %1165 = vmatprep.mubr.f32.mxu0 %v127
  %1166 = vmatmul.mubr.f32.gmra.mxu0 %v126
  %v1167 = vpop.f32.mrf.mxu0
  %v1168 = vadd.f32 %v783, %v1167
  %v1169 = vpop.f32.mrf.mxu0
  %1170 = vmatprep.mubr.f32.mxu0 %v132
  %1171 = vmatmul.mubr.f32.gmra.mxu0 %v131
  %v1172 = vpop.f32.mrf.mxu0
  %v1173 = vadd.f32 %v788, %v1172
  %v1174 = vpop.f32.mrf.mxu0
  %1175 = vmatprep.mubr.f32.mxu0 %v137
  %1176 = vmatmul.mubr.f32.gmra.mxu0 %v136
  %v1177 = vpop.f32.mrf.mxu0
  %v1178 = vadd.f32 %v793, %v1177
  %v1179 = vpop.f32.mrf.mxu0
  %1180 = vmatprep.mubr.f32.mxu0 %v142
  %1181 = vmatmul.mubr.f32.gmra.mxu0 %v141
  %v1182 = vpop.f32.mrf.mxu0
  %v1183 = vadd.f32 %v798, %v1182
  %v1184 = vpop.f32.mrf.mxu0
  %1185 = vmatprep.mubr.f32.mxu0 %v147
  %1186 = vmatmul.mubr.f32.gmra.mxu0 %v146
  %v1187 = vpop.f32.mrf.mxu0
  %v1188 = vadd.f32 %v803, %v1187
  %v1189 = vpop.f32.mrf.mxu0
  %1190 = vmatprep.mubr.f32.mxu0 %v152
  %1191 = vmatmul.mubr.f32.gmra.mxu0 %v151
  %v1192 = vpop.f32.mrf.mxu0
  %v1193 = vadd.f32 %v808, %v1192
  %v1194 = vpop.f32.mrf.mxu0
  %1195 = vmatprep.mubr.f32.mxu0 %v157
  %1196 = vmatmul.mubr.f32.gmra.mxu0 %v156
  %v1197 = vpop.f32.mrf.mxu0
  %v1198 = vadd.f32 %v813, %v1197
  %v1199 = vpop.f32.mrf.mxu0
  %1200 = vmatprep.mubr.f32.mxu0 %v162
  %1201 = vmatmul.mubr.f32.gmra.mxu0 %v161
  %v1202 = vpop.f32.mrf.mxu0
  %v1203 = vadd.f32 %v818, %v1202
  %v1204 = vpop.f32.mrf.mxu0
  %1205 = vmatprep.mubr.f32.mxu0 %v167
  %1206 = vmatmul.mubr.f32.gmra.mxu0 %v166
  %v1207 = vpop.f32.mrf.mxu0
  %v1208 = vadd.f32 %v823, %v1207
  %v1209 = vpop.f32.mrf.mxu0
  %1210 = vmatprep.mubr.f32.mxu0 %v172
  %1211 = vmatmul.mubr.f32.gmra.mxu0 %v171
  %v1212 = vpop.f32.mrf.mxu0
  %v1213 = vadd.f32 %v828, %v1212
  %v1214 = vpop.f32.mrf.mxu0
  %1215 = vmatprep.mubr.f32.mxu0 %v177
  %1216 = vmatmul.mubr.f32.gmra.mxu0 %v176
  %v1217 = vpop.f32.mrf.mxu0
  %v1218 = vadd.f32 %v833, %v1217
  %v1219 = vpop.f32.mrf.mxu0
  %1220 = vmatprep.mubr.f32.mxu0 %v182
  %1221 = vmatmul.mubr.f32.gmra.mxu0 %v181
  %v1222 = vpop.f32.mrf.mxu0
  %v1223 = vadd.f32 %v838, %v1222
  %v1224 = vpop.f32.mrf.mxu0
  %1225 = vmatprep.mubr.f32.mxu0 %v187
  %1226 = vmatmul.mubr.f32.gmra.mxu0 %v186
  %v1227 = vpop.f32.mrf.mxu0
  %v1228 = vadd.f32 %v843, %v1227
  %v1229 = vpop.f32.mrf.mxu0
  %1230 = vmatprep.mubr.f32.mxu0 %v192
  %1231 = vmatmul.mubr.f32.gmra.mxu0 %v191
  %v1232 = vpop.f32.mrf.mxu0
  %v1233 = vadd.f32 %v848, %v1232
  %v1234 = vpop.f32.mrf.mxu0
  %1235 = vmatprep.mubr.f32.mxu0 %v197
  %1236 = vmatmul.mubr.f32.gmra.mxu0 %v196
  %v1237 = vpop.f32.mrf.mxu0
  %v1238 = vadd.f32 %v853, %v1237
  %v1239 = vpop.f32.mrf.mxu0
  %1240 = vmatprep.mubr.f32.mxu0 %v202
  %1241 = vmatmul.mubr.f32.gmra.mxu0 %v201
  %v1242 = vpop.f32.mrf.mxu0
  %v1243 = vadd.f32 %v858, %v1242
  %v1244 = vpop.f32.mrf.mxu0
  %1245 = vmatprep.mubr.f32.mxu0 %v207
  %1246 = vmatmul.mubr.f32.gmra.mxu0 %v206
  %v1247 = vpop.f32.mrf.mxu0
  %v1248 = vadd.f32 %v863, %v1247
  %v1249 = vpop.f32.mrf.mxu0
  %1250 = vmatprep.mubr.f32.mxu0 %v212
  %1251 = vmatmul.mubr.f32.gmra.mxu0 %v211
  %v1252 = vpop.f32.mrf.mxu0
  %v1253 = vadd.f32 %v868, %v1252
  %v1254 = vpop.f32.mrf.mxu0
  %1255 = vmatprep.mubr.f32.mxu0 %v217
  %1256 = vmatmul.mubr.f32.gmra.mxu0 %v216
  %v1257 = vpop.f32.mrf.mxu0
  %v1258 = vadd.f32 %v873, %v1257
  %v1259 = vpop.f32.mrf.mxu0
  %1260 = vmatprep.mubr.f32.mxu0 %v222
  %1261 = vmatmul.mubr.f32.gmra.mxu0 %v221
  %v1262 = vpop.f32.mrf.mxu0
  %v1263 = vadd.f32 %v878, %v1262
  %v1264 = vpop.f32.mrf.mxu0
  %1265 = vmatprep.mubr.f32.mxu0 %v227
  %1266 = vmatmul.mubr.f32.gmra.mxu0 %v226
  %v1267 = vpop.f32.mrf.mxu0
  %v1268 = vadd.f32 %v883, %v1267
  %v1269 = vpop.f32.mrf.mxu0
  %1270 = vmatprep.mubr.f32.mxu0 %v232
  %1271 = vmatmul.mubr.f32.gmra.mxu0 %v231
  %v1272 = vpop.f32.mrf.mxu0
  %v1273 = vadd.f32 %v888, %v1272
  %v1274 = vpop.f32.mrf.mxu0
  %1275 = vmatprep.mubr.f32.mxu0 %v237
  %1276 = vmatmul.mubr.f32.gmra.mxu0 %v236
  %v1277 = vpop.f32.mrf.mxu0
  %v1278 = vadd.f32 %v893, %v1277
  %v1279 = vpop.f32.mrf.mxu0
  %1280 = vmatprep.mubr.f32.mxu0 %v242
  %1281 = vmatmul.mubr.f32.gmra.mxu0 %v241
  %v1282 = vpop.f32.mrf.mxu0
  %v1283 = vadd.f32 %v898, %v1282
  %v1284 = vpop.f32.mrf.mxu0
  %1285 = vmatprep.mubr.f32.mxu0 %v247
  %1286 = vmatmul.mubr.f32.gmra.mxu0 %v246
  %v1287 = vpop.f32.mrf.mxu0
  %v1288 = vadd.f32 %v903, %v1287
  %v1289 = vpop.f32.mrf.mxu0
  %1290 = vmatprep.mubr.f32.mxu0 %v252
  %1291 = vmatmul.mubr.f32.gmra.mxu0 %v251
  %v1292 = vpop.f32.mrf.mxu0
  %v1293 = vadd.f32 %v908, %v1292
  %v1294 = vpop.f32.mrf.mxu0
  %1295 = vmatprep.mubr.f32.mxu0 %v257
  %1296 = vmatmul.mubr.f32.gmra.mxu0 %v256
  %v1297 = vpop.f32.mrf.mxu0
  %v1298 = vadd.f32 %v913, %v1297
  %v1299 = vpop.f32.mrf.mxu0
  %1300 = vmatprep.mubr.f32.mxu0 %v262
  %1301 = vmatmul.mubr.f32.gmra.mxu0 %v261
  %v1302 = vpop.f32.mrf.mxu0
  %v1303 = vadd.f32 %v918, %v1302
  %v1304 = vpop.f32.mrf.mxu0
  %1305 = vmatprep.mubr.f32.mxu0 %v267
  %1306 = vmatmul.mubr.f32.gmra.mxu0 %v266
  %v1307 = vpop.f32.mrf.mxu0
  %v1308 = vadd.f32 %v923, %v1307
  %v1309 = vpop.f32.mrf.mxu0
  %1310 = vmatprep.mubr.f32.mxu0 %v272
  %1311 = vmatmul.mubr.f32.gmra.mxu0 %v271
  %v1312 = vpop.f32.mrf.mxu0
  %v1313 = vadd.f32 %v928, %v1312
  %v1314 = vpop.f32.mrf.mxu0
  %1315 = vmatprep.mubr.f32.mxu0 %v277
  %1316 = vmatmul.mubr.f32.gmra.mxu0 %v276
  %v1317 = vpop.f32.mrf.mxu0
  %v1318 = vadd.f32 %v933, %v1317
  %v1319 = vpop.f32.mrf.mxu0
  %1320 = vmatprep.mubr.f32.mxu0 %v282
  %1321 = vmatmul.mubr.f32.gmra.mxu0 %v281
  %v1322 = vpop.f32.mrf.mxu0
  %v1323 = vadd.f32 %v938, %v1322
  %v1324 = vpop.f32.mrf.mxu0
  %1325 = vmatprep.mubr.f32.mxu0 %v287
  %1326 = vmatmul.mubr.f32.gmra.mxu0 %v286
  %v1327 = vpop.f32.mrf.mxu0
  %v1328 = vadd.f32 %v943, %v1327
  %v1329 = vpop.f32.mrf.mxu0
  %1330 = vmatprep.mubr.f32.mxu0 %v292
  %1331 = vmatmul.mubr.f32.gmra.mxu0 %v291
  %v1332 = vpop.f32.mrf.mxu0
  %v1333 = vadd.f32 %v948, %v1332
  %v1334 = vpop.f32.mrf.mxu0
  %1335 = vmatprep.mubr.f32.mxu0 %v297
  %1336 = vmatmul.mubr.f32.gmra.mxu0 %v296
  %v1337 = vpop.f32.mrf.mxu0
  %v1338 = vadd.f32 %v953, %v1337
  %v1339 = vpop.f32.mrf.mxu0
  %1340 = vmatprep.mubr.f32.mxu0 %v302
  %1341 = vmatmul.mubr.f32.gmra.mxu0 %v301
  %v1342 = vpop.f32.mrf.mxu0
  %v1343 = vadd.f32 %v958, %v1342
  %v1344 = vpop.f32.mrf.mxu0
  %1345 = vmatprep.mubr.f32.mxu0 %v307
  %1346 = vmatmul.mubr.f32.gmra.mxu0 %v306
  %v1347 = vpop.f32.mrf.mxu0
  %v1348 = vadd.f32 %v963, %v1347
  %v1349 = vpop.f32.mrf.mxu0
  %1350 = vmatprep.mubr.f32.mxu0 %v312
  %1351 = vmatmul.mubr.f32.gmra.mxu0 %v311
  %v1352 = vpop.f32.mrf.mxu0
  %v1353 = vadd.f32 %v968, %v1352
  %v1354 = vpop.f32.mrf.mxu0
  %1355 = vmatprep.mubr.f32.mxu0 %v317
  %1356 = vmatmul.mubr.f32.gmra.mxu0 %v316
  %v1357 = vpop.f32.mrf.mxu0
  %v1358 = vadd.f32 %v973, %v1357
  %v1359 = vpop.f32.mrf.mxu0
  %1360 = vmatprep.mubr.f32.mxu0 %v322
  %1361 = vmatmul.mubr.f32.gmra.mxu0 %v321
  %v1362 = vpop.f32.mrf.mxu0
  %v1363 = vadd.f32 %v978, %v1362
  %v1364 = vpop.f32.mrf.mxu0
  %1365 = vmatprep.mubr.f32.mxu0 %v327
  %1366 = vmatmul.mubr.f32.gmra.mxu0 %v326
  %v1367 = vpop.f32.mrf.mxu0
  %v1368 = vadd.f32 %v983, %v1367
  %v1369 = vpop.f32.mrf.mxu0
  %1370 = vmatprep.mubr.f32.mxu0 %v332
  %1371 = vmatmul.mubr.f32.gmra.mxu0 %v331
  %v1372 = vpop.f32.mrf.mxu0
  %v1373 = vadd.f32 %v988, %v1372
  %v1374 = vpop.f32.mrf.mxu0
  %1375 = vdwg.mxu0
  %1376 = vmatprep.subr.mxu0 0.0
  %1377 = vmatpush1.msra.mxu0 0.0
  %1378 = vmatprep.subr.mxu0 0.0
  %1379 = vmatpush1.msra.mxu0 0.0
  %1380 = vmatprep.subr.mxu0 0.0
  %1381 = vmatpush1.msra.mxu0 0.0
  %1382 = vmatprep.subr.mxu0 0.0
  %1383 = vmatpush1.msra.mxu0 0.0
  %1384 = vmatprep.subr.mxu0 0.0
  %1385 = vmatpush1.msra.mxu0 0.0
  %1386 = vmatprep.subr.mxu0 0.0
  %1387 = vmatpush1.msra.mxu0 0.0
  %1388 = vmatprep.subr.mxu0 0.0
  %1389 = vmatpush1.msra.mxu0 0.0
  %1390 = vmatprep.subr.mxu0 0.0
  %1391 = vmatpush1.msra.mxu0 0.0
  %1392 = vmatprep.subr.mxu0 0.0
  %1393 = vmatpush1.msra.mxu0 %v405
  %1394 = vmatprep.subr.mxu0 0.0
  %1395 = vmatpush1.msra.mxu0 %v404
  %1396 = vmatprep.subr.mxu0 0.0
  %1397 = vmatpush1.msra.mxu0 %v403
  %1398 = vmatprep.subr.mxu0 0.0
  %1399 = vmatpush1.msra.mxu0 %v402
  %1400 = vmatprep.subr.mxu0 0.0
  %1401 = vmatpush1.msra.mxu0 %v401
  %1402 = vmatprep.subr.mxu0 0.0
  %1403 = vmatpush1.msra.mxu0 %v400
  %1404 = vmatprep.subr.mxu0 0.0
  %1405 = vmatpush1.msra.mxu0 %v399
  %1406 = vmatprep.subr.mxu0 0.0
  %1407 = vmatpush1.msra.mxu0 %v398
  %1408 = vmatprep.subr.mxu0 0.0
  %1409 = vmatpush2.msra.mxu0 0.0
  %1410 = vmatprep.subr.mxu0 0.0
  %1411 = vmatpush2.msra.mxu0 0.0
  %1412 = vmatprep.subr.mxu0 0.0
  %1413 = vmatpush2.msra.mxu0 0.0
  %1414 = vmatprep.subr.mxu0 0.0
  %1415 = vmatpush2.msra.mxu0 0.0
  %1416 = vmatprep.subr.mxu0 0.0
  %1417 = vmatpush2.msra.mxu0 0.0
  %1418 = vmatprep.subr.mxu0 0.0
  %1419 = vmatpush2.msra.mxu0 0.0
  %1420 = vmatprep.subr.mxu0 0.0
  %1421 = vmatpush2.msra.mxu0 0.0
  %1422 = vmatprep.subr.mxu0 0.0
  %1423 = vmatpush2.msra.mxu0 0.0
  %1424 = vmatprep.subr.mxu0 0.0
  %1425 = vmatpush2.msra.mxu0 0.0
  %1426 = vmatprep.subr.mxu0 0.0
  %1427 = vmatpush2.msra.mxu0 0.0
  %1428 = vmatprep.subr.mxu0 0.0
  %1429 = vmatpush2.msra.mxu0 0.0
  %1430 = vmatprep.subr.mxu0 0.0
  %1431 = vmatpush2.msra.mxu0 0.0
  %1432 = vmatprep.subr.mxu0 0.0
  %1433 = vmatpush2.msra.mxu0 0.0
  %1434 = vmatprep.subr.mxu0 0.0
  %1435 = vmatpush2.msra.mxu0 0.0
  %1436 = vmatprep.subr.mxu0 0.0
  %1437 = vmatpush2.msra.mxu0 0.0
  %1438 = vmatprep.subr.mxu0 0.0
  %1439 = vmatpush2.msra.mxu0 0.0
  %1440 = vmatprep.mubr.f32.mxu0 0.0
  %1441 = vmatmul.mubr.f32.gmra.mxu0 %v415
  %v1442 = vpop.f32.mrf.mxu0
  %v1443 = vadd.f32 %v1058, %v1442
  %v1444 = vpop.f32.mrf.mxu0
  %1445 = vmatprep.mubr.f32.mxu0 0.0
  %1446 = vmatmul.mubr.f32.gmra.mxu0 %v418
  %v1447 = vpop.f32.mrf.mxu0
  %v1448 = vadd.f32 %v1063, %v1447
  %v1449 = vpop.f32.mrf.mxu0
  %1450 = vmatprep.mubr.f32.mxu0 0.0
  %1451 = vmatmul.mubr.f32.gmra.mxu0 %v421
  %v1452 = vpop.f32.mrf.mxu0
  %v1453 = vadd.f32 %v1068, %v1452
  %v1454 = vpop.f32.mrf.mxu0
  %1455 = vmatprep.mubr.f32.mxu0 0.0
  %1456 = vmatmul.mubr.f32.gmra.mxu0 %v424
  %v1457 = vpop.f32.mrf.mxu0
  %v1458 = vadd.f32 %v1073, %v1457
  %v1459 = vpop.f32.mrf.mxu0
  %1460 = vmatprep.mubr.f32.mxu0 0.0
  %1461 = vmatmul.mubr.f32.gmra.mxu0 %v427
  %v1462 = vpop.f32.mrf.mxu0
  %v1463 = vadd.f32 %v1078, %v1462
  %v1464 = vpop.f32.mrf.mxu0
  %1465 = vmatprep.mubr.f32.mxu0 0.0
  %1466 = vmatmul.mubr.f32.gmra.mxu0 %v430
  %v1467 = vpop.f32.mrf.mxu0
  %v1468 = vadd.f32 %v1083, %v1467
  %v1469 = vpop.f32.mrf.mxu0
  %1470 = vmatprep.mubr.f32.mxu0 0.0
  %1471 = vmatmul.mubr.f32.gmra.mxu0 %v433
  %v1472 = vpop.f32.mrf.mxu0
  %v1473 = vadd.f32 %v1088, %v1472
  %v1474 = vpop.f32.mrf.mxu0
  %1475 = vmatprep.mubr.f32.mxu0 0.0
  %1476 = vmatmul.mubr.f32.gmra.mxu0 %v436
  %v1477 = vpop.f32.mrf.mxu0
  %v1478 = vadd.f32 %v1093, %v1477
  %v1479 = vpop.f32.mrf.mxu0
  %1480 = vmatprep.mubr.f32.mxu0 0.0
  %1481 = vmatmul.mubr.f32.gmra.mxu0 %v439
  %v1482 = vpop.f32.mrf.mxu0
  %v1483 = vadd.f32 %v1098, %v1482
  %v1484 = vpop.f32.mrf.mxu0
  %1485 = vmatprep.mubr.f32.mxu0 0.0
  %1486 = vmatmul.mubr.f32.gmra.mxu0 %v442
  %v1487 = vpop.f32.mrf.mxu0
  %v1488 = vadd.f32 %v1103, %v1487
  %v1489 = vpop.f32.mrf.mxu0
  %1490 = vmatprep.mubr.f32.mxu0 0.0
  %1491 = vmatmul.mubr.f32.gmra.mxu0 %v445
  %v1492 = vpop.f32.mrf.mxu0
  %v1493 = vadd.f32 %v1108, %v1492
  %v1494 = vpop.f32.mrf.mxu0
  %1495 = vmatprep.mubr.f32.mxu0 0.0
  %1496 = vmatmul.mubr.f32.gmra.mxu0 %v448
  %v1497 = vpop.f32.mrf.mxu0
  %v1498 = vadd.f32 %v1113, %v1497
  %v1499 = vpop.f32.mrf.mxu0
  %1500 = vmatprep.mubr.f32.mxu0 0.0
  %1501 = vmatmul.mubr.f32.gmra.mxu0 %v451
  %v1502 = vpop.f32.mrf.mxu0
  %v1503 = vadd.f32 %v1118, %v1502
  %v1504 = vpop.f32.mrf.mxu0
  %1505 = vmatprep.mubr.f32.mxu0 0.0
  %1506 = vmatmul.mubr.f32.gmra.mxu0 %v454
  %v1507 = vpop.f32.mrf.mxu0
  %v1508 = vadd.f32 %v1123, %v1507
  %v1509 = vpop.f32.mrf.mxu0
  %1510 = vmatprep.mubr.f32.mxu0 0.0
  %1511 = vmatmul.mubr.f32.gmra.mxu0 %v457
  %v1512 = vpop.f32.mrf.mxu0
  %v1513 = vadd.f32 %v1128, %v1512
  %v1514 = vpop.f32.mrf.mxu0
  %1515 = vmatprep.mubr.f32.mxu0 0.0
  %1516 = vmatmul.mubr.f32.gmra.mxu0 %v460
  %v1517 = vpop.f32.mrf.mxu0
  %v1518 = vadd.f32 %v1133, %v1517
  %v1519 = vpop.f32.mrf.mxu0
  %1520 = vmatprep.mubr.f32.mxu0 0.0
  %1521 = vmatmul.mubr.f32.gmra.mxu0 %v463
  %v1522 = vpop.f32.mrf.mxu0
  %v1523 = vadd.f32 %v1138, %v1522
  %v1524 = vpop.f32.mrf.mxu0
  %1525 = vmatprep.mubr.f32.mxu0 0.0
  %1526 = vmatmul.mubr.f32.gmra.mxu0 %v466
  %v1527 = vpop.f32.mrf.mxu0
  %v1528 = vadd.f32 %v1143, %v1527
  %v1529 = vpop.f32.mrf.mxu0
  %1530 = vmatprep.mubr.f32.mxu0 0.0
  %1531 = vmatmul.mubr.f32.gmra.mxu0 %v469
  %v1532 = vpop.f32.mrf.mxu0
  %v1533 = vadd.f32 %v1148, %v1532
  %v1534 = vpop.f32.mrf.mxu0
  %1535 = vmatprep.mubr.f32.mxu0 0.0
  %1536 = vmatmul.mubr.f32.gmra.mxu0 %v472
  %v1537 = vpop.f32.mrf.mxu0
  %v1538 = vadd.f32 %v1153, %v1537
  %v1539 = vpop.f32.mrf.mxu0
  %1540 = vmatprep.mubr.f32.mxu0 0.0
  %1541 = vmatmul.mubr.f32.gmra.mxu0 %v475
  %v1542 = vpop.f32.mrf.mxu0
  %v1543 = vadd.f32 %v1158, %v1542
  %v1544 = vpop.f32.mrf.mxu0
  %1545 = vmatprep.mubr.f32.mxu0 0.0
  %1546 = vmatmul.mubr.f32.gmra.mxu0 %v478
  %v1547 = vpop.f32.mrf.mxu0
  %v1548 = vadd.f32 %v1163, %v1547
  %v1549 = vpop.f32.mrf.mxu0
  %1550 = vmatprep.mubr.f32.mxu0 0.0
  %1551 = vmatmul.mubr.f32.gmra.mxu0 %v481
  %v1552 = vpop.f32.mrf.mxu0
  %v1553 = vadd.f32 %v1168, %v1552
  %v1554 = vpop.f32.mrf.mxu0
  %1555 = vmatprep.mubr.f32.mxu0 0.0
  %1556 = vmatmul.mubr.f32.gmra.mxu0 %v484
  %v1557 = vpop.f32.mrf.mxu0
  %v1558 = vadd.f32 %v1173, %v1557
  %v1559 = vpop.f32.mrf.mxu0
  %1560 = vmatprep.mubr.f32.mxu0 0.0
  %1561 = vmatmul.mubr.f32.gmra.mxu0 %v487
  %v1562 = vpop.f32.mrf.mxu0
  %v1563 = vadd.f32 %v1178, %v1562
  %v1564 = vpop.f32.mrf.mxu0
  %1565 = vmatprep.mubr.f32.mxu0 0.0
  %1566 = vmatmul.mubr.f32.gmra.mxu0 %v490
  %v1567 = vpop.f32.mrf.mxu0
  %v1568 = vadd.f32 %v1183, %v1567
  %v1569 = vpop.f32.mrf.mxu0
  %1570 = vmatprep.mubr.f32.mxu0 0.0
  %1571 = vmatmul.mubr.f32.gmra.mxu0 %v493
  %v1572 = vpop.f32.mrf.mxu0
  %v1573 = vadd.f32 %v1188, %v1572
  %v1574 = vpop.f32.mrf.mxu0
  %1575 = vmatprep.mubr.f32.mxu0 0.0
  %1576 = vmatmul.mubr.f32.gmra.mxu0 %v496
  %v1577 = vpop.f32.mrf.mxu0
  %v1578 = vadd.f32 %v1193, %v1577
  %v1579 = vpop.f32.mrf.mxu0
  %1580 = vmatprep.mubr.f32.mxu0 0.0
  %1581 = vmatmul.mubr.f32.gmra.mxu0 %v499
  %v1582 = vpop.f32.mrf.mxu0
  %v1583 = vadd.f32 %v1198, %v1582
  %v1584 = vpop.f32.mrf.mxu0
  %1585 = vmatprep.mubr.f32.mxu0 0.0
  %1586 = vmatmul.mubr.f32.gmra.mxu0 %v502
  %v1587 = vpop.f32.mrf.mxu0
  %v1588 = vadd.f32 %v1203, %v1587
  %v1589 = vpop.f32.mrf.mxu0
  %1590 = vmatprep.mubr.f32.mxu0 0.0
  %1591 = vmatmul.mubr.f32.gmra.mxu0 %v505
  %v1592 = vpop.f32.mrf.mxu0
  %v1593 = vadd.f32 %v1208, %v1592
  %v1594 = vpop.f32.mrf.mxu0
  %1595 = vmatprep.mubr.f32.mxu0 0.0
  %1596 = vmatmul.mubr.f32.gmra.mxu0 %v508
  %v1597 = vpop.f32.mrf.mxu0
  %v1598 = vadd.f32 %v1213, %v1597
  %v1599 = vpop.f32.mrf.mxu0
  %1600 = vmatprep.mubr.f32.mxu0 0.0
  %1601 = vmatmul.mubr.f32.gmra.mxu0 %v511
  %v1602 = vpop.f32.mrf.mxu0
  %v1603 = vadd.f32 %v1218, %v1602
  %v1604 = vpop.f32.mrf.mxu0
  %1605 = vmatprep.mubr.f32.mxu0 0.0
  %1606 = vmatmul.mubr.f32.gmra.mxu0 %v514
  %v1607 = vpop.f32.mrf.mxu0
  %v1608 = vadd.f32 %v1223, %v1607
  %v1609 = vpop.f32.mrf.mxu0
  %1610 = vmatprep.mubr.f32.mxu0 0.0
  %1611 = vmatmul.mubr.f32.gmra.mxu0 %v517
  %v1612 = vpop.f32.mrf.mxu0
  %v1613 = vadd.f32 %v1228, %v1612
  %v1614 = vpop.f32.mrf.mxu0
  %1615 = vmatprep.mubr.f32.mxu0 0.0
  %1616 = vmatmul.mubr.f32.gmra.mxu0 %v520
  %v1617 = vpop.f32.mrf.mxu0
  %v1618 = vadd.f32 %v1233, %v1617
  %v1619 = vpop.f32.mrf.mxu0
  %1620 = vmatprep.mubr.f32.mxu0 0.0
  %1621 = vmatmul.mubr.f32.gmra.mxu0 %v523
  %v1622 = vpop.f32.mrf.mxu0
  %v1623 = vadd.f32 %v1238, %v1622
  %v1624 = vpop.f32.mrf.mxu0
  %1625 = vmatprep.mubr.f32.mxu0 0.0
  %1626 = vmatmul.mubr.f32.gmra.mxu0 %v526
  %v1627 = vpop.f32.mrf.mxu0
  %v1628 = vadd.f32 %v1243, %v1627
  %v1629 = vpop.f32.mrf.mxu0
  %1630 = vmatprep.mubr.f32.mxu0 0.0
  %1631 = vmatmul.mubr.f32.gmra.mxu0 %v529
  %v1632 = vpop.f32.mrf.mxu0
  %v1633 = vadd.f32 %v1248, %v1632
  %v1634 = vpop.f32.mrf.mxu0
  %1635 = vmatprep.mubr.f32.mxu0 0.0
  %1636 = vmatmul.mubr.f32.gmra.mxu0 %v532
  %v1637 = vpop.f32.mrf.mxu0
  %v1638 = vadd.f32 %v1253, %v1637
  %v1639 = vpop.f32.mrf.mxu0
  %1640 = vmatprep.mubr.f32.mxu0 0.0
  %1641 = vmatmul.mubr.f32.gmra.mxu0 %v535
  %v1642 = vpop.f32.mrf.mxu0
  %v1643 = vadd.f32 %v1258, %v1642
  %v1644 = vpop.f32.mrf.mxu0
  %1645 = vmatprep.mubr.f32.mxu0 0.0
  %1646 = vmatmul.mubr.f32.gmra.mxu0 %v538
  %v1647 = vpop.f32.mrf.mxu0
  %v1648 = vadd.f32 %v1263, %v1647
  %v1649 = vpop.f32.mrf.mxu0
  %1650 = vmatprep.mubr.f32.mxu0 0.0
  %1651 = vmatmul.mubr.f32.gmra.mxu0 %v541
  %v1652 = vpop.f32.mrf.mxu0
  %v1653 = vadd.f32 %v1268, %v1652
  %v1654 = vpop.f32.mrf.mxu0
  %1655 = vmatprep.mubr.f32.mxu0 0.0
  %1656 = vmatmul.mubr.f32.gmra.mxu0 %v544
  %v1657 = vpop.f32.mrf.mxu0
  %v1658 = vadd.f32 %v1273, %v1657
  %v1659 = vpop.f32.mrf.mxu0
  %1660 = vmatprep.mubr.f32.mxu0 0.0
  %1661 = vmatmul.mubr.f32.gmra.mxu0 %v547
  %v1662 = vpop.f32.mrf.mxu0
  %v1663 = vadd.f32 %v1278, %v1662
  %v1664 = vpop.f32.mrf.mxu0
  %1665 = vmatprep.mubr.f32.mxu0 0.0
  %1666 = vmatmul.mubr.f32.gmra.mxu0 %v550
  %v1667 = vpop.f32.mrf.mxu0
  %v1668 = vadd.f32 %v1283, %v1667
  %v1669 = vpop.f32.mrf.mxu0
  %1670 = vmatprep.mubr.f32.mxu0 0.0
  %1671 = vmatmul.mubr.f32.gmra.mxu0 %v553
  %v1672 = vpop.f32.mrf.mxu0
  %v1673 = vadd.f32 %v1288, %v1672
  %v1674 = vpop.f32.mrf.mxu0
  %1675 = vmatprep.mubr.f32.mxu0 0.0
  %1676 = vmatmul.mubr.f32.gmra.mxu0 %v556
  %v1677 = vpop.f32.mrf.mxu0
  %v1678 = vadd.f32 %v1293, %v1677
  %v1679 = vpop.f32.mrf.mxu0
  %1680 = vmatprep.mubr.f32.mxu0 0.0
  %1681 = vmatmul.mubr.f32.gmra.mxu0 %v559
  %v1682 = vpop.f32.mrf.mxu0
  %v1683 = vadd.f32 %v1298, %v1682
  %v1684 = vpop.f32.mrf.mxu0
  %1685 = vmatprep.mubr.f32.mxu0 0.0
  %1686 = vmatmul.mubr.f32.gmra.mxu0 %v562
  %v1687 = vpop.f32.mrf.mxu0
  %v1688 = vadd.f32 %v1303, %v1687
  %v1689 = vpop.f32.mrf.mxu0
  %1690 = vmatprep.mubr.f32.mxu0 0.0
  %1691 = vmatmul.mubr.f32.gmra.mxu0 %v565
  %v1692 = vpop.f32.mrf.mxu0
  %v1693 = vadd.f32 %v1308, %v1692
  %v1694 = vpop.f32.mrf.mxu0
  %1695 = vmatprep.mubr.f32.mxu0 0.0
  %1696 = vmatmul.mubr.f32.gmra.mxu0 %v568
  %v1697 = vpop.f32.mrf.mxu0
  %v1698 = vadd.f32 %v1313, %v1697
  %v1699 = vpop.f32.mrf.mxu0
  %1700 = vmatprep.mubr.f32.mxu0 0.0
  %1701 = vmatmul.mubr.f32.gmra.mxu0 %v571
  %v1702 = vpop.f32.mrf.mxu0
  %v1703 = vadd.f32 %v1318, %v1702
  %v1704 = vpop.f32.mrf.mxu0
  %1705 = vmatprep.mubr.f32.mxu0 0.0
  %1706 = vmatmul.mubr.f32.gmra.mxu0 %v574
  %v1707 = vpop.f32.mrf.mxu0
  %v1708 = vadd.f32 %v1323, %v1707
  %v1709 = vpop.f32.mrf.mxu0
  %1710 = vmatprep.mubr.f32.mxu0 0.0
  %1711 = vmatmul.mubr.f32.gmra.mxu0 %v577
  %v1712 = vpop.f32.mrf.mxu0
  %v1713 = vadd.f32 %v1328, %v1712
  %v1714 = vpop.f32.mrf.mxu0
  %1715 = vmatprep.mubr.f32.mxu0 0.0
  %1716 = vmatmul.mubr.f32.gmra.mxu0 %v580
  %v1717 = vpop.f32.mrf.mxu0
  %v1718 = vadd.f32 %v1333, %v1717
  %v1719 = vpop.f32.mrf.mxu0
  %1720 = vmatprep.mubr.f32.mxu0 0.0
  %1721 = vmatmul.mubr.f32.gmra.mxu0 %v583
  %v1722 = vpop.f32.mrf.mxu0
  %v1723 = vadd.f32 %v1338, %v1722
  %v1724 = vpop.f32.mrf.mxu0
  %1725 = vmatprep.mubr.f32.mxu0 0.0
  %1726 = vmatmul.mubr.f32.gmra.mxu0 %v586
  %v1727 = vpop.f32.mrf.mxu0
  %v1728 = vadd.f32 %v1343, %v1727
  %v1729 = vpop.f32.mrf.mxu0
  %1730 = vmatprep.mubr.f32.mxu0 0.0
  %1731 = vmatmul.mubr.f32.gmra.mxu0 %v589
  %v1732 = vpop.f32.mrf.mxu0
  %v1733 = vadd.f32 %v1348, %v1732
  %v1734 = vpop.f32.mrf.mxu0
  %1735 = vmatprep.mubr.f32.mxu0 0.0
  %1736 = vmatmul.mubr.f32.gmra.mxu0 %v592
  %v1737 = vpop.f32.mrf.mxu0
  %v1738 = vadd.f32 %v1353, %v1737
  %v1739 = vpop.f32.mrf.mxu0
  %1740 = vmatprep.mubr.f32.mxu0 0.0
  %1741 = vmatmul.mubr.f32.gmra.mxu0 %v595
  %v1742 = vpop.f32.mrf.mxu0
  %v1743 = vadd.f32 %v1358, %v1742
  %v1744 = vpop.f32.mrf.mxu0
  %1745 = vmatprep.mubr.f32.mxu0 0.0
  %1746 = vmatmul.mubr.f32.gmra.mxu0 %v598
  %v1747 = vpop.f32.mrf.mxu0
  %v1748 = vadd.f32 %v1363, %v1747
  %v1749 = vpop.f32.mrf.mxu0
  %1750 = vmatprep.mubr.f32.mxu0 0.0
  %1751 = vmatmul.mubr.f32.gmra.mxu0 %v601
  %v1752 = vpop.f32.mrf.mxu0
  %v1753 = vadd.f32 %v1368, %v1752
  %v1754 = vpop.f32.mrf.mxu0
  %1755 = vmatprep.mubr.f32.mxu0 0.0
  %1756 = vmatmul.mubr.f32.gmra.mxu0 %v604
  %v1757 = vpop.f32.mrf.mxu0
  %v1758 = vadd.f32 %v1373, %v1757
  %v1759 = vpop.f32.mrf.mxu0
  %1760 = vdwg.mxu0
  %v1761 = vmax.f32 %v1443, 0.0
  %v1762 = vmax.f32 %v1448, 0.0
  %v1763 = vmax.f32 %v1453, 0.0
  %v1764 = vmax.f32 %v1458, 0.0
  %v1765 = vmax.f32 %v1463, 0.0
  %v1766 = vmax.f32 %v1468, 0.0
  %v1767 = vmax.f32 %v1473, 0.0
  %v1768 = vmax.f32 %v1478, 0.0
  %v1769 = vmax.f32 %v1483, 0.0
  %v1770 = vmax.f32 %v1488, 0.0
  %v1771 = vmax.f32 %v1493, 0.0
  %v1772 = vmax.f32 %v1498, 0.0
  %v1773 = vmax.f32 %v1503, 0.0
  %v1774 = vmax.f32 %v1508, 0.0
  %v1775 = vmax.f32 %v1513, 0.0
  %v1776 = vmax.f32 %v1518, 0.0
  %v1777 = vmax.f32 %v1523, 0.0
  %v1778 = vmax.f32 %v1528, 0.0
  %v1779 = vmax.f32 %v1533, 0.0
  %v1780 = vmax.f32 %v1538, 0.0
  %v1781 = vmax.f32 %v1543, 0.0
  %v1782 = vmax.f32 %v1548, 0.0
  %v1783 = vmax.f32 %v1553, 0.0
  %v1784 = vmax.f32 %v1558, 0.0
  %v1785 = vmax.f32 %v1563, 0.0
  %v1786 = vmax.f32 %v1568, 0.0
  %v1787 = vmax.f32 %v1573, 0.0
  %v1788 = vmax.f32 %v1578, 0.0
  %v1789 = vmax.f32 %v1583, 0.0
  %v1790 = vmax.f32 %v1588, 0.0
  %v1791 = vmax.f32 %v1593, 0.0
  %v1792 = vmax.f32 %v1598, 0.0
  %v1793 = vmax.f32 %v1603, 0.0
  %v1794 = vmax.f32 %v1608, 0.0
  %v1795 = vmax.f32 %v1613, 0.0
  %v1796 = vmax.f32 %v1618, 0.0
  %v1797 = vmax.f32 %v1623, 0.0
  %v1798 = vmax.f32 %v1628, 0.0
  %v1799 = vmax.f32 %v1633, 0.0
  %v1800 = vmax.f32 %v1638, 0.0
  %v1801 = vmax.f32 %v1643, 0.0
  %v1802 = vmax.f32 %v1648, 0.0
  %v1803 = vmax.f32 %v1653, 0.0
  %v1804 = vmax.f32 %v1658, 0.0
  %v1805 = vmax.f32 %v1663, 0.0
  %v1806 = vmax.f32 %v1668, 0.0
  %v1807 = vmax.f32 %v1673, 0.0
  %v1808 = vmax.f32 %v1678, 0.0
  %v1809 = vmax.f32 %v1683, 0.0
  %v1810 = vmax.f32 %v1688, 0.0
  %v1811 = vmax.f32 %v1693, 0.0
  %v1812 = vmax.f32 %v1698, 0.0
  %v1813 = vmax.f32 %v1703, 0.0
  %v1814 = vmax.f32 %v1708, 0.0
  %v1815 = vmax.f32 %v1713, 0.0
  %v1816 = vmax.f32 %v1718, 0.0
  %v1817 = vmax.f32 %v1723, 0.0
  %v1818 = vmax.f32 %v1728, 0.0
  %v1819 = vmax.f32 %v1733, 0.0
  %v1820 = vmax.f32 %v1738, 0.0
  %v1821 = vmax.f32 %v1743, 0.0
  %v1822 = vmax.f32 %v1748, 0.0
  %v1823 = vmax.f32 %v1753, 0.0
  %v1824 = vmax.f32 %v1758, 0.0
  %1825 = vst [vmem:[%s3] sm:$0xff] %v1761
  %1826 = vst [vmem:[%s3 + $0x8] sm:$0xff] %v1762
  %1827 = vst [vmem:[%s3 + $0x10] sm:$0xff] %v1763
  %1828 = vst [vmem:[%s3 + $0x18] sm:$0xff] %v1764
  %1829 = vst [vmem:[%s3 + $0x20] sm:$0xff] %v1765
  %1830 = vst [vmem:[%s3 + $0x28] sm:$0xff] %v1766
  %1831 = vst [vmem:[%s3 + $0x30] sm:$0xff] %v1767
  %1832 = vst [vmem:[%s3 + $0x38] sm:$0xff] %v1768
  %1833 = vst [vmem:[%s3 + $0x40] sm:$0xff] %v1769
  %1834 = vst [vmem:[%s3 + $0x48] sm:$0xff] %v1770
  %1835 = vst [vmem:[%s3 + $0x50] sm:$0xff] %v1771
  %1836 = vst [vmem:[%s3 + $0x58] sm:$0xff] %v1772
  %1837 = vst [vmem:[%s3 + $0x60] sm:$0xff] %v1773
  %1838 = vst [vmem:[%s3 + $0x68] sm:$0xff] %v1774
  %1839 = vst [vmem:[%s3 + $0x70] sm:$0xff] %v1775
  %1840 = vst [vmem:[%s3 + $0x78] sm:$0xff] %v1776
  %1841 = vst [vmem:[%s3 + $0x80] sm:$0xff] %v1777
  %1842 = vst [vmem:[%s3 + $0x88] sm:$0xff] %v1778
  %1843 = vst [vmem:[%s3 + $0x90] sm:$0xff] %v1779
  %1844 = vst [vmem:[%s3 + $0x98] sm:$0xff] %v1780
  %1845 = vst [vmem:[%s3 + $0xa0] sm:$0xff] %v1781
  %1846 = vst [vmem:[%s3 + $0xa8] sm:$0xff] %v1782
  %1847 = vst [vmem:[%s3 + $0xb0] sm:$0xff] %v1783
  %1848 = vst [vmem:[%s3 + $0xb8] sm:$0xff] %v1784
  %1849 = vst [vmem:[%s3 + $0xc0] sm:$0xff] %v1785
  %1850 = vst [vmem:[%s3 + $0xc8] sm:$0xff] %v1786
  %1851 = vst [vmem:[%s3 + $0xd0] sm:$0xff] %v1787
  %1852 = vst [vmem:[%s3 + $0xd8] sm:$0xff] %v1788
  %1853 = vst [vmem:[%s3 + $0xe0] sm:$0xff] %v1789
  %1854 = vst [vmem:[%s3 + $0xe8] sm:$0xff] %v1790
  %1855 = vst [vmem:[%s3 + $0xf0] sm:$0xff] %v1791
  %1856 = vst [vmem:[%s3 + $0xf8] sm:$0xff] %v1792
  %1857 = vst [vmem:[%s3 + $0x100] sm:$0xff] %v1793
  %1858 = vst [vmem:[%s3 + $0x108] sm:$0xff] %v1794
  %1859 = vst [vmem:[%s3 + $0x110] sm:$0xff] %v1795
  %1860 = vst [vmem:[%s3 + $0x118] sm:$0xff] %v1796
  %1861 = vst [vmem:[%s3 + $0x120] sm:$0xff] %v1797
  %1862 = vst [vmem:[%s3 + $0x128] sm:$0xff] %v1798
  %1863 = vst [vmem:[%s3 + $0x130] sm:$0xff] %v1799
  %1864 = vst [vmem:[%s3 + $0x138] sm:$0xff] %v1800
  %1865 = vst [vmem:[%s3 + $0x140] sm:$0xff] %v1801
  %1866 = vst [vmem:[%s3 + $0x148] sm:$0xff] %v1802
  %1867 = vst [vmem:[%s3 + $0x150] sm:$0xff] %v1803
  %1868 = vst [vmem:[%s3 + $0x158] sm:$0xff] %v1804
  %1869 = vst [vmem:[%s3 + $0x160] sm:$0xff] %v1805
  %1870 = vst [vmem:[%s3 + $0x168] sm:$0xff] %v1806
  %1871 = vst [vmem:[%s3 + $0x170] sm:$0xff] %v1807
  %1872 = vst [vmem:[%s3 + $0x178] sm:$0xff] %v1808
  %1873 = vst [vmem:[%s3 + $0x180] sm:$0xff] %v1809
  %1874 = vst [vmem:[%s3 + $0x188] sm:$0xff] %v1810
  %1875 = vst [vmem:[%s3 + $0x190] sm:$0xff] %v1811
  %1876 = vst [vmem:[%s3 + $0x198] sm:$0xff] %v1812
  %1877 = vst [vmem:[%s3 + $0x1a0] sm:$0xff] %v1813
  %1878 = vst [vmem:[%s3 + $0x1a8] sm:$0xff] %v1814
  %1879 = vst [vmem:[%s3 + $0x1b0] sm:$0xff] %v1815
  %1880 = vst [vmem:[%s3 + $0x1b8] sm:$0xff] %v1816
  %1881 = vst [vmem:[%s3 + $0x1c0] sm:$0xff] %v1817
  %1882 = vst [vmem:[%s3 + $0x1c8] sm:$0xff] %v1818
  %1883 = vst [vmem:[%s3 + $0x1d0] sm:$0xff] %v1819
  %1884 = vst [vmem:[%s3 + $0x1d8] sm:$0xff] %v1820
  %1885 = vst [vmem:[%s3 + $0x1e0] sm:$0xff] %v1821
  %1886 = vst [vmem:[%s3 + $0x1e8] sm:$0xff] %v1822
  %1887 = vst [vmem:[%s3 + $0x1f0] sm:$0xff] %v1823
  %1888 = vst [vmem:[%s3 + $0x1f8] sm:$0xff] %v1824
  // Predicated region
  $region14: #{decoder_forward.4} parent=0 // pred_check
    _
  $region15: #{decoder_forward.4} parent=0 // pred_check_branch
    %1890 = sbr.rel (0) target = $region17
  $region16: #{decoder_forward.4} parent=0 // pred_region
    _
  $region17: #{decoder_forward.4} parent=0 // pred_fallthru
    _
  // Predicated region
  $region18: #{decoder_forward.4} parent=0 // pred_check
    _
  $region19: #{decoder_forward.4} parent=0 // pred_check_branch
    %1892 = sbr.rel (0) target = $region21
  $region20: #{decoder_forward.4} parent=0 // pred_region
    _
  $region21: #{decoder_forward.4} parent=0 // pred_fallthru
    _

// kernel: decoder_forward.5
$region0: #{decoder_forward.5}
  #allocation0 [shape = 'u32[]', space=smem, size = 0x4, offset = 0x4, fixed_abs, tag = 'smem constant byte address 0x4 - core index']
  #allocation1 [shape = 'u32[144,128]{1,0:T(1,128)}', space=vmem, size = 0x12000, scoped, tag = 'internal scratch']
  %s0 = inlined_call_operand.vmem [shape: f32[338,128], index: 0, kind: input, shape index: {}]
  %s1 = inlined_call_operand.vmem [shape: f32[128,128], index: 1, kind: input, shape index: {}]
  %s2 = inlined_call_operand.vmem [shape: f32[1,128], index: 2, kind: input, shape index: {}]
  %s3 = inlined_call_operand.vmem [shape: f32[338,128], index: 3, kind: output, shape index: {}]
  %s4 = sld [smem:[#allocation0]]
  $region22: #{decoder_forward.5} parent=0
    _
  %s6 = ssub.s32 1, %s4
  %s7 = scalar_select 0, %s6, %s4
  // Predicated region
  $region2: #{decoder_forward.5} parent=0 // pred_check
    _
  $region3: #{decoder_forward.5} parent=0 // pred_check_branch
    %9 = sbr.rel (0) target = $region5
  $region4: #{decoder_forward.5} parent=0 // pred_region
    _
  $region5: #{decoder_forward.5} parent=0 // pred_fallthru
    _
  // Predicated region
  $region6: #{decoder_forward.5} parent=0 // pred_check
    _
  $region7: #{decoder_forward.5} parent=0 // pred_check_branch
    %11 = sbr.rel (0) target = $region9
  $region8: #{decoder_forward.5} parent=0 // pred_region
    _
  $region9: #{decoder_forward.5} parent=0 // pred_fallthru
    _
  // Predicated region
  $region10: #{decoder_forward.5} parent=0 // pred_check
    _
  $region11: #{decoder_forward.5} parent=0 // pred_check_branch
    %13 = sbr.rel (0) target = $region13
  $region12: #{decoder_forward.5} parent=0 // pred_region
    _
  $region13: #{decoder_forward.5} parent=0 // pred_fallthru
    _
  %v14 = vld [vmem:[%s0] sm:$0xff]
  %v15 = vld [vmem:[%s0 + $0x8] sm:$0xff]
  %v16 = vld [vmem:[%s0 + $0x10] sm:$0xff]
  %v17 = vld [vmem:[%s0 + $0x18] sm:$0xff]
  %v18 = vld [vmem:[%s0 + $0x20] sm:$0xff]
  %v19 = vld [vmem:[%s0 + $0x28] sm:$0xff]
  %v20 = vld [vmem:[%s0 + $0x30] sm:$0xff]
  %v21 = vld [vmem:[%s0 + $0x38] sm:$0xff]
  %v22 = vld [vmem:[%s0 + $0x40] sm:$0xff]
  %v23 = vld [vmem:[%s0 + $0x48] sm:$0xff]
  %v24 = vld [vmem:[%s0 + $0x50] sm:$0xff]
  %v25 = vld [vmem:[%s0 + $0x58] sm:$0xff]
  %v26 = vld [vmem:[%s0 + $0x60] sm:$0xff]
  %v27 = vld [vmem:[%s0 + $0x68] sm:$0xff]
  %v28 = vld [vmem:[%s0 + $0x70] sm:$0xff]
  %v29 = vld [vmem:[%s0 + $0x78] sm:$0xff]
  %v30 = vld [vmem:[%s0 + $0x80] sm:$0xff]
  %v31 = vld [vmem:[%s0 + $0x88] sm:$0xff]
  %v32 = vld [vmem:[%s0 + $0x90] sm:$0xff]
  %v33 = vld [vmem:[%s0 + $0x98] sm:$0xff]
  %v34 = vld [vmem:[%s0 + $0xa0] sm:$0xff]
  %v35 = vld [vmem:[%s0 + $0xa8] sm:$0xff]
  %v36 = vld [vmem:[%s0 + $0xb0] sm:$0xff]
  %v37 = vld [vmem:[%s0 + $0xb8] sm:$0xff]
  %v38 = vld [vmem:[%s0 + $0xc0] sm:$0xff]
  %v39 = vld [vmem:[%s0 + $0xc8] sm:$0xff]
  %v40 = vld [vmem:[%s0 + $0xd0] sm:$0xff]
  %v41 = vld [vmem:[%s0 + $0xd8] sm:$0xff]
  %v42 = vld [vmem:[%s0 + $0xe0] sm:$0xff]
  %v43 = vld [vmem:[%s0 + $0xe8] sm:$0xff]
  %v44 = vld [vmem:[%s0 + $0xf0] sm:$0xff]
  %v45 = vld [vmem:[%s0 + $0xf8] sm:$0xff]
  %v46 = vld [vmem:[%s0 + $0x100] sm:$0xff]
  %v47 = vld [vmem:[%s0 + $0x108] sm:$0xff]
  %v48 = vld [vmem:[%s0 + $0x110] sm:$0xff]
  %v49 = vld [vmem:[%s0 + $0x118] sm:$0xff]
  %v50 = vld [vmem:[%s0 + $0x120] sm:$0xff]
  %v51 = vld [vmem:[%s0 + $0x128] sm:$0xff]
  %v52 = vld [vmem:[%s0 + $0x130] sm:$0xff]
  %v53 = vld [vmem:[%s0 + $0x138] sm:$0xff]
  %v54 = vld [vmem:[%s0 + $0x140] sm:$0xff]
  %v55 = vld [vmem:[%s0 + $0x148] sm:$0xff]
  %v56 = vld [vmem:[%s0 + $0x150] sm:$0x3]
  %v57 = vld [vmem:[%s1] sm:$0xff]
  %v58 = vld [vmem:[%s1 + $0x8] sm:$0xff]
  %v59 = vld [vmem:[%s1 + $0x10] sm:$0xff]
  %v60 = vld [vmem:[%s1 + $0x18] sm:$0xff]
  %v61 = vld [vmem:[%s1 + $0x20] sm:$0xff]
  %v62 = vld [vmem:[%s1 + $0x28] sm:$0xff]
  %v63 = vld [vmem:[%s1 + $0x30] sm:$0xff]
  %v64 = vld [vmem:[%s1 + $0x38] sm:$0xff]
  %v65 = vld [vmem:[%s1 + $0x40] sm:$0xff]
  %v66 = vld [vmem:[%s1 + $0x48] sm:$0xff]
  %v67 = vld [vmem:[%s1 + $0x50] sm:$0xff]
  %v68 = vld [vmem:[%s1 + $0x58] sm:$0xff]
  %v69 = vld [vmem:[%s1 + $0x60] sm:$0xff]
  %v70 = vld [vmem:[%s1 + $0x68] sm:$0xff]
  %v71 = vld [vmem:[%s1 + $0x70] sm:$0xff]
  %v72 = vld [vmem:[%s1 + $0x78] sm:$0xff]
  %v73 = vld [vmem:[%s2] sm:$0x1]
  %v75 = vlaneseq
  %v76 = vshrl.u32 %v75, 7
  %v77 = vsub.s32 0, %v76
  %v78 = vrot.slane %v73, %v77
  %80 = vmatprep.subr.mxu0 0.0
  %81 = vmatpush1.msra.mxu0 %v72
  %82 = vmatprep.subr.mxu0 0.0
  %83 = vmatpush1.msra.mxu0 %v71
  %84 = vmatprep.subr.mxu0 0.0
  %85 = vmatpush1.msra.mxu0 %v70
  %86 = vmatprep.subr.mxu0 0.0
  %87 = vmatpush1.msra.mxu0 %v69
  %88 = vmatprep.subr.mxu0 0.0
  %89 = vmatpush1.msra.mxu0 %v68
  %90 = vmatprep.subr.mxu0 0.0
  %91 = vmatpush1.msra.mxu0 %v67
  %92 = vmatprep.subr.mxu0 0.0
  %93 = vmatpush1.msra.mxu0 %v66
  %94 = vmatprep.subr.mxu0 0.0
  %95 = vmatpush1.msra.mxu0 %v65
  %96 = vmatprep.subr.mxu0 0.0
  %97 = vmatpush1.msra.mxu0 %v64
  %98 = vmatprep.subr.mxu0 0.0
  %99 = vmatpush1.msra.mxu0 %v63
  %100 = vmatprep.subr.mxu0 0.0
  %101 = vmatpush1.msra.mxu0 %v62
  %102 = vmatprep.subr.mxu0 0.0
  %103 = vmatpush1.msra.mxu0 %v61
  %104 = vmatprep.subr.mxu0 0.0
  %105 = vmatpush1.msra.mxu0 %v60
  %106 = vmatprep.subr.mxu0 0.0
  %107 = vmatpush1.msra.mxu0 %v59
  %108 = vmatprep.subr.mxu0 0.0
  %109 = vmatpush1.msra.mxu0 %v58
  %110 = vmatprep.subr.mxu0 0.0
  %111 = vmatpush1.msra.mxu0 %v57
  %112 = vmatprep.subr.mxu0 0.0
  %113 = vmatpush2.msra.mxu0 0.0
  %114 = vmatprep.subr.mxu0 0.0
  %115 = vmatpush2.msra.mxu0 0.0
  %116 = vmatprep.subr.mxu0 0.0
  %117 = vmatpush2.msra.mxu0 0.0
  %118 = vmatprep.subr.mxu0 0.0
  %119 = vmatpush2.msra.mxu0 0.0
  %120 = vmatprep.subr.mxu0 0.0
  %121 = vmatpush2.msra.mxu0 0.0
  %122 = vmatprep.subr.mxu0 0.0
  %123 = vmatpush2.msra.mxu0 0.0
  %124 = vmatprep.subr.mxu0 0.0
  %125 = vmatpush2.msra.mxu0 0.0
  %126 = vmatprep.subr.mxu0 0.0
  %127 = vmatpush2.msra.mxu0 0.0
  %128 = vmatprep.subr.mxu0 0.0
  %129 = vmatpush2.msra.mxu0 0.0
  %130 = vmatprep.subr.mxu0 0.0
  %131 = vmatpush2.msra.mxu0 0.0
  %132 = vmatprep.subr.mxu0 0.0
  %133 = vmatpush2.msra.mxu0 0.0
  %134 = vmatprep.subr.mxu0 0.0
  %135 = vmatpush2.msra.mxu0 0.0
  %136 = vmatprep.subr.mxu0 0.0
  %137 = vmatpush2.msra.mxu0 0.0
  %138 = vmatprep.subr.mxu0 0.0
  %139 = vmatpush2.msra.mxu0 0.0
  %140 = vmatprep.subr.mxu0 0.0
  %141 = vmatpush2.msra.mxu0 0.0
  %142 = vmatprep.subr.mxu0 0.0
  %143 = vmatpush2.msra.mxu0 0.0
  %144 = vmatprep.mubr.f32.mxu0 0.0
  %145 = vmatmul.mubr.f32.gmra.mxu0 %v14
  %v146 = vpop.f32.mrf.mxu0
  %v147 = vadd.f32 %v78, %v146
  %v148 = vpop.f32.mrf.mxu0
  %149 = vmatprep.mubr.f32.mxu0 0.0
  %150 = vmatmul.mubr.f32.gmra.mxu0 %v15
  %v151 = vpop.f32.mrf.mxu0
  %v152 = vadd.f32 %v78, %v151
  %v153 = vpop.f32.mrf.mxu0
  %154 = vmatprep.mubr.f32.mxu0 0.0
  %155 = vmatmul.mubr.f32.gmra.mxu0 %v16
  %v156 = vpop.f32.mrf.mxu0
  %v157 = vadd.f32 %v78, %v156
  %v158 = vpop.f32.mrf.mxu0
  %159 = vmatprep.mubr.f32.mxu0 0.0
  %160 = vmatmul.mubr.f32.gmra.mxu0 %v17
  %v161 = vpop.f32.mrf.mxu0
  %v162 = vadd.f32 %v78, %v161
  %v163 = vpop.f32.mrf.mxu0
  %164 = vmatprep.mubr.f32.mxu0 0.0
  %165 = vmatmul.mubr.f32.gmra.mxu0 %v18
  %v166 = vpop.f32.mrf.mxu0
  %v167 = vadd.f32 %v78, %v166
  %v168 = vpop.f32.mrf.mxu0
  %169 = vmatprep.mubr.f32.mxu0 0.0
  %170 = vmatmul.mubr.f32.gmra.mxu0 %v19
  %v171 = vpop.f32.mrf.mxu0
  %v172 = vadd.f32 %v78, %v171
  %v173 = vpop.f32.mrf.mxu0
  %174 = vmatprep.mubr.f32.mxu0 0.0
  %175 = vmatmul.mubr.f32.gmra.mxu0 %v20
  %v176 = vpop.f32.mrf.mxu0
  %v177 = vadd.f32 %v78, %v176
  %v178 = vpop.f32.mrf.mxu0
  %179 = vmatprep.mubr.f32.mxu0 0.0
  %180 = vmatmul.mubr.f32.gmra.mxu0 %v21
  %v181 = vpop.f32.mrf.mxu0
  %v182 = vadd.f32 %v78, %v181
  %v183 = vpop.f32.mrf.mxu0
  %184 = vmatprep.mubr.f32.mxu0 0.0
  %185 = vmatmul.mubr.f32.gmra.mxu0 %v22
  %v186 = vpop.f32.mrf.mxu0
  %v187 = vadd.f32 %v78, %v186
  %v188 = vpop.f32.mrf.mxu0
  %189 = vmatprep.mubr.f32.mxu0 0.0
  %190 = vmatmul.mubr.f32.gmra.mxu0 %v23
  %v191 = vpop.f32.mrf.mxu0
  %v192 = vadd.f32 %v78, %v191
  %v193 = vpop.f32.mrf.mxu0
  %194 = vmatprep.mubr.f32.mxu0 0.0
  %195 = vmatmul.mubr.f32.gmra.mxu0 %v24
  %v196 = vpop.f32.mrf.mxu0
  %v197 = vadd.f32 %v78, %v196
  %v198 = vpop.f32.mrf.mxu0
  %199 = vmatprep.mubr.f32.mxu0 0.0
  %200 = vmatmul.mubr.f32.gmra.mxu0 %v25
  %v201 = vpop.f32.mrf.mxu0
  %v202 = vadd.f32 %v78, %v201
  %v203 = vpop.f32.mrf.mxu0
  %204 = vmatprep.mubr.f32.mxu0 0.0
  %205 = vmatmul.mubr.f32.gmra.mxu0 %v26
  %v206 = vpop.f32.mrf.mxu0
  %v207 = vadd.f32 %v78, %v206
  %v208 = vpop.f32.mrf.mxu0
  %209 = vmatprep.mubr.f32.mxu0 0.0
  %210 = vmatmul.mubr.f32.gmra.mxu0 %v27
  %v211 = vpop.f32.mrf.mxu0
  %v212 = vadd.f32 %v78, %v211
  %v213 = vpop.f32.mrf.mxu0
  %214 = vmatprep.mubr.f32.mxu0 0.0
  %215 = vmatmul.mubr.f32.gmra.mxu0 %v28
  %v216 = vpop.f32.mrf.mxu0
  %v217 = vadd.f32 %v78, %v216
  %v218 = vpop.f32.mrf.mxu0
  %219 = vmatprep.mubr.f32.mxu0 0.0
  %220 = vmatmul.mubr.f32.gmra.mxu0 %v29
  %v221 = vpop.f32.mrf.mxu0
  %v222 = vadd.f32 %v78, %v221
  %v223 = vpop.f32.mrf.mxu0
  %224 = vmatprep.mubr.f32.mxu0 0.0
  %225 = vmatmul.mubr.f32.gmra.mxu0 %v30
  %v226 = vpop.f32.mrf.mxu0
  %v227 = vadd.f32 %v78, %v226
  %v228 = vpop.f32.mrf.mxu0
  %229 = vmatprep.mubr.f32.mxu0 0.0
  %230 = vmatmul.mubr.f32.gmra.mxu0 %v31
  %v231 = vpop.f32.mrf.mxu0
  %v232 = vadd.f32 %v78, %v231
  %v233 = vpop.f32.mrf.mxu0
  %234 = vmatprep.mubr.f32.mxu0 0.0
  %235 = vmatmul.mubr.f32.gmra.mxu0 %v32
  %v236 = vpop.f32.mrf.mxu0
  %v237 = vadd.f32 %v78, %v236
  %v238 = vpop.f32.mrf.mxu0
  %239 = vmatprep.mubr.f32.mxu0 0.0
  %240 = vmatmul.mubr.f32.gmra.mxu0 %v33
  %v241 = vpop.f32.mrf.mxu0
  %v242 = vadd.f32 %v78, %v241
  %v243 = vpop.f32.mrf.mxu0
  %244 = vmatprep.mubr.f32.mxu0 0.0
  %245 = vmatmul.mubr.f32.gmra.mxu0 %v34
  %v246 = vpop.f32.mrf.mxu0
  %v247 = vadd.f32 %v78, %v246
  %v248 = vpop.f32.mrf.mxu0
  %249 = vmatprep.mubr.f32.mxu0 0.0
  %250 = vmatmul.mubr.f32.gmra.mxu0 %v35
  %v251 = vpop.f32.mrf.mxu0
  %v252 = vadd.f32 %v78, %v251
  %v253 = vpop.f32.mrf.mxu0
  %254 = vmatprep.mubr.f32.mxu0 0.0
  %255 = vmatmul.mubr.f32.gmra.mxu0 %v36
  %v256 = vpop.f32.mrf.mxu0
  %v257 = vadd.f32 %v78, %v256
  %v258 = vpop.f32.mrf.mxu0
  %259 = vmatprep.mubr.f32.mxu0 0.0
  %260 = vmatmul.mubr.f32.gmra.mxu0 %v37
  %v261 = vpop.f32.mrf.mxu0
  %v262 = vadd.f32 %v78, %v261
  %v263 = vpop.f32.mrf.mxu0
  %264 = vmatprep.mubr.f32.mxu0 0.0
  %265 = vmatmul.mubr.f32.gmra.mxu0 %v38
  %v266 = vpop.f32.mrf.mxu0
  %v267 = vadd.f32 %v78, %v266
  %v268 = vpop.f32.mrf.mxu0
  %269 = vmatprep.mubr.f32.mxu0 0.0
  %270 = vmatmul.mubr.f32.gmra.mxu0 %v39
  %v271 = vpop.f32.mrf.mxu0
  %v272 = vadd.f32 %v78, %v271
  %v273 = vpop.f32.mrf.mxu0
  %274 = vmatprep.mubr.f32.mxu0 0.0
  %275 = vmatmul.mubr.f32.gmra.mxu0 %v40
  %v276 = vpop.f32.mrf.mxu0
  %v277 = vadd.f32 %v78, %v276
  %v278 = vpop.f32.mrf.mxu0
  %279 = vmatprep.mubr.f32.mxu0 0.0
  %280 = vmatmul.mubr.f32.gmra.mxu0 %v41
  %v281 = vpop.f32.mrf.mxu0
  %v282 = vadd.f32 %v78, %v281
  %v283 = vpop.f32.mrf.mxu0
  %284 = vmatprep.mubr.f32.mxu0 0.0
  %285 = vmatmul.mubr.f32.gmra.mxu0 %v42
  %v286 = vpop.f32.mrf.mxu0
  %v287 = vadd.f32 %v78, %v286
  %v288 = vpop.f32.mrf.mxu0
  %289 = vmatprep.mubr.f32.mxu0 0.0
  %290 = vmatmul.mubr.f32.gmra.mxu0 %v43
  %v291 = vpop.f32.mrf.mxu0
  %v292 = vadd.f32 %v78, %v291
  %v293 = vpop.f32.mrf.mxu0
  %294 = vmatprep.mubr.f32.mxu0 0.0
  %295 = vmatmul.mubr.f32.gmra.mxu0 %v44
  %v296 = vpop.f32.mrf.mxu0
  %v297 = vadd.f32 %v78, %v296
  %v298 = vpop.f32.mrf.mxu0
  %299 = vmatprep.mubr.f32.mxu0 0.0
  %300 = vmatmul.mubr.f32.gmra.mxu0 %v45
  %v301 = vpop.f32.mrf.mxu0
  %v302 = vadd.f32 %v78, %v301
  %v303 = vpop.f32.mrf.mxu0
  %304 = vmatprep.mubr.f32.mxu0 0.0
  %305 = vmatmul.mubr.f32.gmra.mxu0 %v46
  %v306 = vpop.f32.mrf.mxu0
  %v307 = vadd.f32 %v78, %v306
  %v308 = vpop.f32.mrf.mxu0
  %309 = vmatprep.mubr.f32.mxu0 0.0
  %310 = vmatmul.mubr.f32.gmra.mxu0 %v47
  %v311 = vpop.f32.mrf.mxu0
  %v312 = vadd.f32 %v78, %v311
  %v313 = vpop.f32.mrf.mxu0
  %314 = vmatprep.mubr.f32.mxu0 0.0
  %315 = vmatmul.mubr.f32.gmra.mxu0 %v48
  %v316 = vpop.f32.mrf.mxu0
  %v317 = vadd.f32 %v78, %v316
  %v318 = vpop.f32.mrf.mxu0
  %319 = vmatprep.mubr.f32.mxu0 0.0
  %320 = vmatmul.mubr.f32.gmra.mxu0 %v49
  %v321 = vpop.f32.mrf.mxu0
  %v322 = vadd.f32 %v78, %v321
  %v323 = vpop.f32.mrf.mxu0
  %324 = vmatprep.mubr.f32.mxu0 0.0
  %325 = vmatmul.mubr.f32.gmra.mxu0 %v50
  %v326 = vpop.f32.mrf.mxu0
  %v327 = vadd.f32 %v78, %v326
  %v328 = vpop.f32.mrf.mxu0
  %329 = vmatprep.mubr.f32.mxu0 0.0
  %330 = vmatmul.mubr.f32.gmra.mxu0 %v51
  %v331 = vpop.f32.mrf.mxu0
  %v332 = vadd.f32 %v78, %v331
  %v333 = vpop.f32.mrf.mxu0
  %334 = vmatprep.mubr.f32.mxu0 0.0
  %335 = vmatmul.mubr.f32.gmra.mxu0 %v52
  %v336 = vpop.f32.mrf.mxu0
  %v337 = vadd.f32 %v78, %v336
  %v338 = vpop.f32.mrf.mxu0
  %339 = vmatprep.mubr.f32.mxu0 0.0
  %340 = vmatmul.mubr.f32.gmra.mxu0 %v53
  %v341 = vpop.f32.mrf.mxu0
  %v342 = vadd.f32 %v78, %v341
  %v343 = vpop.f32.mrf.mxu0
  %344 = vmatprep.mubr.f32.mxu0 0.0
  %345 = vmatmul.mubr.f32.gmra.mxu0 %v54
  %v346 = vpop.f32.mrf.mxu0
  %v347 = vadd.f32 %v78, %v346
  %v348 = vpop.f32.mrf.mxu0
  %349 = vmatprep.mubr.f32.mxu0 0.0
  %350 = vmatmul.mubr.f32.gmra.mxu0 %v55
  %v351 = vpop.f32.mrf.mxu0
  %v352 = vadd.f32 %v78, %v351
  %v353 = vpop.f32.mrf.mxu0
  %354 = vmatprep.mubr.f32.mxu0 0.0
  %355 = vmatmul.mubr.f32.gmra.mxu0 %v56
  %v356 = vpop.f32.mrf.mxu0
  %v357 = vadd.f32 %v78, %v356
  %v358 = vpop.f32.mrf.mxu0
  %359 = vdwg.mxu0
  %360 = vst [vmem:[%s3] sm:$0xff] %v147
  %361 = vst [vmem:[%s3 + $0x8] sm:$0xff] %v152
  %362 = vst [vmem:[%s3 + $0x10] sm:$0xff] %v157
  %363 = vst [vmem:[%s3 + $0x18] sm:$0xff] %v162
  %364 = vst [vmem:[%s3 + $0x20] sm:$0xff] %v167
  %365 = vst [vmem:[%s3 + $0x28] sm:$0xff] %v172
  %366 = vst [vmem:[%s3 + $0x30] sm:$0xff] %v177
  %367 = vst [vmem:[%s3 + $0x38] sm:$0xff] %v182
  %368 = vst [vmem:[%s3 + $0x40] sm:$0xff] %v187
  %369 = vst [vmem:[%s3 + $0x48] sm:$0xff] %v192
  %370 = vst [vmem:[%s3 + $0x50] sm:$0xff] %v197
  %371 = vst [vmem:[%s3 + $0x58] sm:$0xff] %v202
  %372 = vst [vmem:[%s3 + $0x60] sm:$0xff] %v207
  %373 = vst [vmem:[%s3 + $0x68] sm:$0xff] %v212
  %374 = vst [vmem:[%s3 + $0x70] sm:$0xff] %v217
  %375 = vst [vmem:[%s3 + $0x78] sm:$0xff] %v222
  %376 = vst [vmem:[%s3 + $0x80] sm:$0xff] %v227
  %377 = vst [vmem:[%s3 + $0x88] sm:$0xff] %v232
  %378 = vst [vmem:[%s3 + $0x90] sm:$0xff] %v237
  %379 = vst [vmem:[%s3 + $0x98] sm:$0xff] %v242
  %380 = vst [vmem:[%s3 + $0xa0] sm:$0xff] %v247
  %381 = vst [vmem:[%s3 + $0xa8] sm:$0xff] %v252
  %382 = vst [vmem:[%s3 + $0xb0] sm:$0xff] %v257
  %383 = vst [vmem:[%s3 + $0xb8] sm:$0xff] %v262
  %384 = vst [vmem:[%s3 + $0xc0] sm:$0xff] %v267
  %385 = vst [vmem:[%s3 + $0xc8] sm:$0xff] %v272
  %386 = vst [vmem:[%s3 + $0xd0] sm:$0xff] %v277
  %387 = vst [vmem:[%s3 + $0xd8] sm:$0xff] %v282
  %388 = vst [vmem:[%s3 + $0xe0] sm:$0xff] %v287
  %389 = vst [vmem:[%s3 + $0xe8] sm:$0xff] %v292
  %390 = vst [vmem:[%s3 + $0xf0] sm:$0xff] %v297
  %391 = vst [vmem:[%s3 + $0xf8] sm:$0xff] %v302
  %392 = vst [vmem:[%s3 + $0x100] sm:$0xff] %v307
  %393 = vst [vmem:[%s3 + $0x108] sm:$0xff] %v312
  %394 = vst [vmem:[%s3 + $0x110] sm:$0xff] %v317
  %395 = vst [vmem:[%s3 + $0x118] sm:$0xff] %v322
  %396 = vst [vmem:[%s3 + $0x120] sm:$0xff] %v327
  %397 = vst [vmem:[%s3 + $0x128] sm:$0xff] %v332
  %398 = vst [vmem:[%s3 + $0x130] sm:$0xff] %v337
  %399 = vst [vmem:[%s3 + $0x138] sm:$0xff] %v342
  %400 = vst [vmem:[%s3 + $0x140] sm:$0xff] %v347
  %401 = vst [vmem:[%s3 + $0x148] sm:$0xff] %v352
  %402 = vst [vmem:[%s3 + $0x150] sm:$0x3] %v357
  // Predicated region
  $region14: #{decoder_forward.5} parent=0 // pred_check
    _
  $region15: #{decoder_forward.5} parent=0 // pred_check_branch
    %404 = sbr.rel (0) target = $region17
  $region16: #{decoder_forward.5} parent=0 // pred_region
    _
  $region17: #{decoder_forward.5} parent=0 // pred_fallthru
    _
  // Predicated region
  $region18: #{decoder_forward.5} parent=0 // pred_check
    _
  $region19: #{decoder_forward.5} parent=0 // pred_check_branch
    %406 = sbr.rel (0) target = $region21
  $region20: #{decoder_forward.5} parent=0 // pred_region
    _
  $region21: #{decoder_forward.5} parent=0 // pred_fallthru
    _

</llo_original>
